<compile_context>
chip_gen: v7x
topology: tpu7x:2x2x1
jax: 0.10.0
libtpu: 0.0.40
codegen_flags: <defaults>
</compile_context>

<pallas_src>
import jax
import jax.numpy as jnp
from jax import lax
from jax.experimental import pallas as pl
from jax.experimental.pallas import tpu as pltpu

PARAM_DTYPE = jnp.bfloat16   # weights / x on the MXU; accumulation stays f32
OUT_LANES = 128              # lane-dense padded width of the fc output


def _bf16_activations_supported():
    """bf16 EUP/VPU exists on v6e/v7x; v5e (and older) should stay f32."""
    try:
        kind = jax.devices()[0].device_kind.lower()
    except Exception:
        return False
    return ("v6" in kind) or ("v7" in kind)


ACT_DTYPE = jnp.bfloat16 if _bf16_activations_supported() else jnp.float32


def lstm_kernel(x_ref,    # (T*Bp, D)  time-major flattened: row = t*Bp + b
                wih_ref,  # (D, 4H)    W_ih^T, gate order [i,f,o,g], i/f/o pre-scaled by 0.5
                whh_ref,  # (H, 4H)    W_hh^T, same reorder/scale
                b_ref,    # (1, 4H)    b_ih + b_hh, same reorder/scale (f32)
                fcw_ref,  # (H, OUT_LANES)  fc weight, real data in column 0
                fcb_ref,  # (1, OUT_LANES)  fc bias, real data in column 0
                out_ref,  # (Bp, OUT_LANES) f32 output
                xg_ref):  # VMEM scratch (T*Bp, 4H) f32: precomputed gate slab
    Bp = out_ref.shape[0]
    T = x_ref.shape[0] // Bp
    H = whh_ref.shape[0]

    # --- Hoisted input projection for all timesteps (one MXU matmul), with
    #     the combined (reordered, pre-scaled) bias folded in once.  Runs once,
    #     off the per-step critical path; D=16 narrow lanes are fine here. ---
    xg_ref[...] = (
        jnp.dot(x_ref[...], wih_ref[...], preferred_element_type=jnp.float32)
        + b_ref[...]
    )

    h0 = jnp.zeros((Bp, H), jnp.float32)
    c0 = jnp.zeros((Bp, H), jnp.float32)

    def step(ts, carry):
        h, c = carry
        row = pl.multiple_of(ts * Bp, Bp)
        xg_t = xg_ref[pl.ds(row, Bp), :]                       # (Bp, 4H) f32
        # Recurrent matmul; whh_ref indexed here (no long-lived vreg hoist).
        gates = xg_t + jnp.dot(h.astype(PARAM_DTYPE), whh_ref[...],
                               preferred_element_type=jnp.float32)
        # Gate layout is [i, f, o, g]; the i/f/o preactivations were already
        # halved via the weights, so a single tanh over the whole tile gives
        # sigmoid via 0.5*tanh(0.5*x)+0.5 and tanh for g in ONE EUP group.
        t_all = jnp.tanh(gates.astype(ACT_DTYPE))              # (Bp, 4H)
        sig = (0.5 * t_all[:, 0:3 * H] + 0.5).astype(jnp.float32)
        i_g = sig[:, 0 * H:1 * H]
        f_g = sig[:, 1 * H:2 * H]
        o_g = sig[:, 2 * H:3 * H]
        g_g = t_all[:, 3 * H:4 * H].astype(jnp.float32)
        # Cell-state math stays in float32.
        c_new = f_g * c + i_g * g_g
        h_new = o_g * jnp.tanh(c_new)
        return (h_new, c_new)

    h_T, _ = lax.fori_loop(0, T, step, (h0, c0), unroll=True)

    # Final fc on h_T against a lane-padded weight -> lane-dense store.
    out_ref[...] = (
        jnp.dot(h_T.astype(fcw_ref.dtype), fcw_ref[...],
                preferred_element_type=jnp.float32)
        + fcb_ref[...]
    )


def prepare_lstm_params(w_ih, w_hh, b_ih, b_hh, fc_w, fc_b):
    """One-time parameter prep (keep OUT of the per-call hot path).

    - Reorders the PyTorch gate blocks [i, f, g, o] -> [i, f, o, g].
    - Pre-scales the sigmoid (i/f/o) blocks by 0.5 so the kernel only needs
      tanh (sigmoid(x) = 0.5*tanh(0.5*x)+0.5); scaling by 0.5 is exact in bf16.
    - Transposes to (D,4H)/(H,4H), casts weights to bf16, combines biases,
      lane-pads the fc weight/bias to OUT_LANES.
    """
    H = w_hh.shape[1]

    def reorder(m):  # m: (4H, ...) or (4H,), torch row blocks [i, f, g, o]
        return jnp.concatenate(
            [0.5 * m[0 * H:1 * H],       # i (pre-scaled for tanh-sigmoid)
             0.5 * m[1 * H:2 * H],       # f
             0.5 * m[3 * H:4 * H],       # o
             m[2 * H:3 * H]],            # g (plain tanh)
            axis=0)

    wih_t = jnp.transpose(reorder(w_ih.astype(jnp.float32))).astype(PARAM_DTYPE)
    whh_t = jnp.transpose(reorder(w_hh.astype(jnp.float32))).astype(PARAM_DTYPE)
    bias = reorder((b_ih + b_hh).astype(jnp.float32)).reshape(1, 4 * H)

    fcw_p = jnp.pad(jnp.transpose(fc_w),
                    ((0, 0), (0, OUT_LANES - fc_w.shape[0]))).astype(PARAM_DTYPE)
    fcb_p = jnp.pad(fc_b.reshape(1, -1).astype(jnp.float32),
                    ((0, 0), (0, OUT_LANES - fc_b.shape[0])))
    return (wih_t, whh_t, bias, fcw_p, fcb_p)


@jax.jit
def lstm_model_forward(x, params):
    """x: (B, T, D) batch-first, like the PyTorch module. Returns (B, 1) f32."""
    wih_t, whh_t, bias, fcw_p, fcb_p = params
    B, T, D = x.shape
    H = whh_t.shape[0]
    G = 4 * H
    Bp = ((B + 7) // 8) * 8    # pad batch to a sublane multiple

    # Per-call glue: time-major, batch padded, flattened so row = t*Bp + b.
    x_tm = jnp.transpose(x, (1, 0, 2))                             # (T, B, D)
    x_tm = jnp.pad(x_tm, ((0, 0), (0, Bp - B), (0, 0)))
    x_flat = x_tm.reshape(T * Bp, D).astype(PARAM_DTYPE)           # (T*Bp, D)

    out_full = pl.pallas_call(
        lstm_kernel,
        out_shape=jax.ShapeDtypeStruct((Bp, OUT_LANES), jnp.float32),
        grid_spec=pltpu.PrefetchScalarGridSpec(
            num_scalar_prefetch=0,
            grid=(1,),   # single grid point: whole recurrence in one invocation
            in_specs=[
                pl.BlockSpec((T * Bp, D), lambda i: (0, 0)),       # x (flat)
                pl.BlockSpec((D, G), lambda i: (0, 0)),            # W_ih^T
                pl.BlockSpec((H, G), lambda i: (0, 0)),            # W_hh^T
                pl.BlockSpec((1, G), lambda i: (0, 0)),            # bias
                pl.BlockSpec((H, OUT_LANES), lambda i: (0, 0)),    # fc_w (pad)
                pl.BlockSpec((1, OUT_LANES), lambda i: (0, 0)),    # fc_b (pad)
            ],
            out_specs=pl.BlockSpec((Bp, OUT_LANES), lambda i: (0, 0)),
            scratch_shapes=[
                pltpu.VMEM((T * Bp, G), jnp.float32),              # gate slab
            ],
        ),
        compiler_params=pltpu.CompilerParams(
            dimension_semantics=("arbitrary",)),
    )(x_flat, wih_t, whh_t, bias, fcw_p, fcb_p)

    return out_full[:B, 0:1]


def reference_forward(x, w_ih, w_hh, b_ih, b_hh, fc_w, fc_b):
    """Pure-JAX f32 reference of the PyTorch LSTMModel forward."""
    B, T, D = x.shape
    H = w_hh.shape[1]
    h = jnp.zeros((B, H), jnp.float32)
    c = jnp.zeros((B, H), jnp.float32)

    def step(carry, x_t):
        h, c = carry
        gates = x_t @ w_ih.T + h @ w_hh.T + b_ih + b_hh
        i = jax.nn.sigmoid(gates[:, 0 * H:1 * H])
        f = jax.nn.sigmoid(gates[:, 1 * H:2 * H])
        g = jnp.tanh(gates[:, 2 * H:3 * H])
        o = jax.nn.sigmoid(gates[:, 3 * H:4 * H])
        c = f * c + i * g
        h = o * jnp.tanh(c)
        return (h, c), None

    (h, c), _ = jax.lax.scan(step, (h, c), jnp.transpose(x, (1, 0, 2)))
    return h @ fc_w.T + fc_b


if __name__ == "__main__":
    # Small shapes consistent with the module (hidden_dim = 128 per the spec).
    B, T, D, H = 2, 8, 16, 128   # batch, seq, input_dim, hidden_dim

    key = jax.random.PRNGKey(0)
    ks = jax.random.split(key, 7)
    scale = 1.0 / jnp.sqrt(jnp.float32(H))  # PyTorch-style uniform init bound

    x = jax.random.normal(ks[0], (B, T, D), jnp.float32)
    w_ih = jax.random.uniform(ks[1], (4 * H, D), jnp.float32, -scale, scale)
    w_hh = jax.random.uniform(ks[2], (4 * H, H), jnp.float32, -scale, scale)
    b_ih = jax.random.uniform(ks[3], (4 * H,), jnp.float32, -scale, scale)
    b_hh = jax.random.uniform(ks[4], (4 * H,), jnp.float32, -scale, scale)
    fc_w = jax.random.uniform(ks[5], (1, H), jnp.float32, -scale, scale)
    fc_b = jax.random.uniform(ks[6], (1,), jnp.float32, -scale, scale)

    # One-time parameter prep (hoisted out of the per-call hot path).
    params = prepare_lstm_params(w_ih, w_hh, b_ih, b_hh, fc_w, fc_b)
    params = jax.tree_util.tree_map(jax.block_until_ready, params)

    out = lstm_model_forward(x, params)
    out = jax.block_until_ready(out)

    ref = reference_forward(x, w_ih, w_hh, b_ih, b_hh, fc_w, fc_b)
    assert out.shape == (B, 1), out.shape
    # bf16 weights/inputs (and bf16 gate activations on v6e/v7x) with f32
    # accumulation / cell state -> relaxed tolerance vs the all-f32 reference.
    assert jnp.allclose(out, ref, atol=3e-2, rtol=3e-2), (out, ref)

    print("KERNEL_OK")
</pallas_src>

<mosaic_0001>
module attributes {stable_mosaic.version = 11 : i64} {
  func.func @lstm_kernel(%arg0: i32, %arg1: memref<64x16xbf16, #tpu.memory_space<vmem>>, %arg2: memref<16x512xbf16, #tpu.memory_space<vmem>>, %arg3: memref<128x512xbf16, #tpu.memory_space<vmem>>, %arg4: memref<1x512xf32, #tpu.memory_space<vmem>>, %arg5: memref<128x128xbf16, #tpu.memory_space<vmem>>, %arg6: memref<1x128xf32, #tpu.memory_space<vmem>>, %arg7: memref<8x128xf32, #tpu.memory_space<vmem>>, %arg8: memref<64x512xf32, #tpu.memory_space<vmem>>) attributes {dimension_semantics = [#tpu.dimension_semantics<arbitrary>], iteration_bounds = array<i64: 1>, scalar_prefetch = 0 : i64, scratch_operands = 1 : i64, tpu.core_type = #tpu.core_type<tc>, window_params = [{pipeline_mode = #tpu.pipeline_mode<synchronous>, transform_indices = @transform_0, window_bounds = array<i64: 64, 16>}, {pipeline_mode = #tpu.pipeline_mode<synchronous>, transform_indices = @transform_1, window_bounds = array<i64: 16, 512>}, {pipeline_mode = #tpu.pipeline_mode<synchronous>, transform_indices = @transform_2, window_bounds = array<i64: 128, 512>}, {pipeline_mode = #tpu.pipeline_mode<synchronous>, transform_indices = @transform_3, window_bounds = array<i64: 1, 512>}, {pipeline_mode = #tpu.pipeline_mode<synchronous>, transform_indices = @transform_4, window_bounds = array<i64: 128, 128>}, {pipeline_mode = #tpu.pipeline_mode<synchronous>, transform_indices = @transform_5, window_bounds = array<i64: 1, 128>}, {pipeline_mode = #tpu.pipeline_mode<synchronous>, transform_indices = @transform_6, window_bounds = array<i64: 8, 128>}]} {
    %c0 = arith.constant 0 : index
    %c0_0 = arith.constant 0 : index
    %0 = vector.load %arg1[%c0, %c0_0] : memref<64x16xbf16, #tpu.memory_space<vmem>>, vector<64x16xbf16>
    %c0_1 = arith.constant 0 : index
    %c0_2 = arith.constant 0 : index
    %1 = vector.load %arg2[%c0_1, %c0_2] : memref<16x512xbf16, #tpu.memory_space<vmem>>, vector<16x512xbf16>
    %cst = arith.constant dense<0.000000e+00> : vector<64x512xf32>
    %2 = tpu.matmul %0, %1, %cst {dimension_numbers = #tpu.dot_dimension_numbers<[1], [0], [0], [1], [0, 0, 1, 1], [], []>} : vector<64x16xbf16>, vector<16x512xbf16>, vector<64x512xf32> -> vector<64x512xf32>
    %c0_3 = arith.constant 0 : index
    %c0_4 = arith.constant 0 : index
    %3 = vector.load %arg4[%c0_3, %c0_4] : memref<1x512xf32, #tpu.memory_space<vmem>>, vector<1x512xf32>
    %4 = vector.broadcast %3 : vector<1x512xf32> to vector<64x512xf32>
    %5 = arith.addf %2, %4 : vector<64x512xf32>
    %c0_5 = arith.constant 0 : index
    %c0_6 = arith.constant 0 : index
    %6 = vector.load %arg8[%c0_5, %c0_6] : memref<64x512xf32, #tpu.memory_space<vmem>>, vector<64x512xf32>
    tpu.vector_store %arg8[%c0_5, %c0_6], %5 {strides = array<i32>} : memref<64x512xf32, #tpu.memory_space<vmem>>, vector<64x512xf32>,
    %cst_7 = arith.constant 0.000000e+00 : f32
    %7 = vector.broadcast %cst_7 : f32 to vector<8x128xf32>
    %cst_8 = arith.constant 0.000000e+00 : f32
    %8 = vector.broadcast %cst_8 : f32 to vector<8x128xf32>
    %c0_i32 = arith.constant 0 : i32
    %c8_i32 = arith.constant 8 : i32
    %9 = arith.muli %c0_i32, %c8_i32 : i32
    %10 = tpu.assume_multiple %9, 8 : i32
    %11 = arith.index_cast %10 : i32 to index
    %c0_9 = arith.constant 0 : index
    %12 = vector.load %arg8[%11, %c0_9] : memref<64x512xf32, #tpu.memory_space<vmem>>, vector<8x512xf32>
    %13 = arith.truncf %7 : vector<8x128xf32> to vector<8x128xbf16>
    %c0_10 = arith.constant 0 : index
    %c0_11 = arith.constant 0 : index
    %14 = vector.load %arg3[%c0_10, %c0_11] : memref<128x512xbf16, #tpu.memory_space<vmem>>, vector<128x512xbf16>
    %cst_12 = arith.constant dense<0.000000e+00> : vector<8x512xf32>
    %15 = tpu.matmul %13, %14, %cst_12 {dimension_numbers = #tpu.dot_dimension_numbers<[1], [0], [0], [1], [0, 0, 1, 1], [], []>} : vector<8x128xbf16>, vector<128x512xbf16>, vector<8x512xf32> -> vector<8x512xf32>
    %16 = arith.addf %12, %15 : vector<8x512xf32>
    %17 = math.tanh %16 : vector<8x512xf32>
    %18 = vector.extract_strided_slice %17 {offsets = [0, 0], sizes = [8, 384], strides = [1, 1]} : vector<8x512xf32> to vector<8x384xf32>
    %cst_13 = arith.constant 5.000000e-01 : f32
    %19 = vector.broadcast %cst_13 : f32 to vector<8x384xf32>
    %20 = arith.mulf %19, %18 : vector<8x384xf32>
    %cst_14 = arith.constant 5.000000e-01 : f32
    %21 = vector.broadcast %cst_14 : f32 to vector<8x384xf32>
    %22 = arith.addf %20, %21 : vector<8x384xf32>
    %23 = vector.extract_strided_slice %22 {offsets = [0, 0], sizes = [8, 128], strides = [1, 1]} : vector<8x384xf32> to vector<8x128xf32>
    %24 = vector.extract_strided_slice %22 {offsets = [0, 128], sizes = [8, 128], strides = [1, 1]} : vector<8x384xf32> to vector<8x128xf32>
    %25 = vector.extract_strided_slice %22 {offsets = [0, 256], sizes = [8, 128], strides = [1, 1]} : vector<8x384xf32> to vector<8x128xf32>
    %26 = vector.extract_strided_slice %17 {offsets = [0, 384], sizes = [8, 128], strides = [1, 1]} : vector<8x512xf32> to vector<8x128xf32>
    %27 = arith.mulf %24, %8 : vector<8x128xf32>
    %28 = arith.mulf %23, %26 : vector<8x128xf32>
    %29 = arith.addf %27, %28 : vector<8x128xf32>
    %30 = math.tanh %29 : vector<8x128xf32>
    %31 = arith.mulf %25, %30 : vector<8x128xf32>
    %c1_i32 = arith.constant 1 : i32
    %c8_i32_15 = arith.constant 8 : i32
    %32 = arith.muli %c1_i32, %c8_i32_15 : i32
    %33 = tpu.assume_multiple %32, 8 : i32
    %34 = arith.index_cast %33 : i32 to index
    %c0_16 = arith.constant 0 : index
    %35 = vector.load %arg8[%34, %c0_16] : memref<64x512xf32, #tpu.memory_space<vmem>>, vector<8x512xf32>
    %36 = arith.truncf %31 : vector<8x128xf32> to vector<8x128xbf16>
    %c0_17 = arith.constant 0 : index
    %c0_18 = arith.constant 0 : index
    %37 = vector.load %arg3[%c0_17, %c0_18] : memref<128x512xbf16, #tpu.memory_space<vmem>>, vector<128x512xbf16>
    %cst_19 = arith.constant dense<0.000000e+00> : vector<8x512xf32>
    %38 = tpu.matmul %36, %37, %cst_19 {dimension_numbers = #tpu.dot_dimension_numbers<[1], [0], [0], [1], [0, 0, 1, 1], [], []>} : vector<8x128xbf16>, vector<128x512xbf16>, vector<8x512xf32> -> vector<8x512xf32>
    %39 = arith.addf %35, %38 : vector<8x512xf32>
    %40 = math.tanh %39 : vector<8x512xf32>
    %41 = vector.extract_strided_slice %40 {offsets = [0, 0], sizes = [8, 384], strides = [1, 1]} : vector<8x512xf32> to vector<8x384xf32>
    %cst_20 = arith.constant 5.000000e-01 : f32
    %42 = vector.broadcast %cst_20 : f32 to vector<8x384xf32>
    %43 = arith.mulf %42, %41 : vector<8x384xf32>
    %cst_21 = arith.constant 5.000000e-01 : f32
    %44 = vector.broadcast %cst_21 : f32 to vector<8x384xf32>
    %45 = arith.addf %43, %44 : vector<8x384xf32>
    %46 = vector.extract_strided_slice %45 {offsets = [0, 0], sizes = [8, 128], strides = [1, 1]} : vector<8x384xf32> to vector<8x128xf32>
    %47 = vector.extract_strided_slice %45 {offsets = [0, 128], sizes = [8, 128], strides = [1, 1]} : vector<8x384xf32> to vector<8x128xf32>
    %48 = vector.extract_strided_slice %45 {offsets = [0, 256], sizes = [8, 128], strides = [1, 1]} : vector<8x384xf32> to vector<8x128xf32>
    %49 = vector.extract_strided_slice %40 {offsets = [0, 384], sizes = [8, 128], strides = [1, 1]} : vector<8x512xf32> to vector<8x128xf32>
    %50 = arith.mulf %47, %29 : vector<8x128xf32>
    %51 = arith.mulf %46, %49 : vector<8x128xf32>
    %52 = arith.addf %50, %51 : vector<8x128xf32>
    %53 = math.tanh %52 : vector<8x128xf32>
    %54 = arith.mulf %48, %53 : vector<8x128xf32>
    %c2_i32 = arith.constant 2 : i32
    %c8_i32_22 = arith.constant 8 : i32
    %55 = arith.muli %c2_i32, %c8_i32_22 : i32
    %56 = tpu.assume_multiple %55, 8 : i32
    %57 = arith.index_cast %56 : i32 to index
    %c0_23 = arith.constant 0 : index
    %58 = vector.load %arg8[%57, %c0_23] : memref<64x512xf32, #tpu.memory_space<vmem>>, vector<8x512xf32>
    %59 = arith.truncf %54 : vector<8x128xf32> to vector<8x128xbf16>
    %c0_24 = arith.constant 0 : index
    %c0_25 = arith.constant 0 : index
    %60 = vector.load %arg3[%c0_24, %c0_25] : memref<128x512xbf16, #tpu.memory_space<vmem>>, vector<128x512xbf16>
    %cst_26 = arith.constant dense<0.000000e+00> : vector<8x512xf32>
    %61 = tpu.matmul %59, %60, %cst_26 {dimension_numbers = #tpu.dot_dimension_numbers<[1], [0], [0], [1], [0, 0, 1, 1], [], []>} : vector<8x128xbf16>, vector<128x512xbf16>, vector<8x512xf32> -> vector<8x512xf32>
    %62 = arith.addf %58, %61 : vector<8x512xf32>
    %63 = math.tanh %62 : vector<8x512xf32>
    %64 = vector.extract_strided_slice %63 {offsets = [0, 0], sizes = [8, 384], strides = [1, 1]} : vector<8x512xf32> to vector<8x384xf32>
    %cst_27 = arith.constant 5.000000e-01 : f32
    %65 = vector.broadcast %cst_27 : f32 to vector<8x384xf32>
    %66 = arith.mulf %65, %64 : vector<8x384xf32>
    %cst_28 = arith.constant 5.000000e-01 : f32
    %67 = vector.broadcast %cst_28 : f32 to vector<8x384xf32>
    %68 = arith.addf %66, %67 : vector<8x384xf32>
    %69 = vector.extract_strided_slice %68 {offsets = [0, 0], sizes = [8, 128], strides = [1, 1]} : vector<8x384xf32> to vector<8x128xf32>
    %70 = vector.extract_strided_slice %68 {offsets = [0, 128], sizes = [8, 128], strides = [1, 1]} : vector<8x384xf32> to vector<8x128xf32>
    %71 = vector.extract_strided_slice %68 {offsets = [0, 256], sizes = [8, 128], strides = [1, 1]} : vector<8x384xf32> to vector<8x128xf32>
    %72 = vector.extract_strided_slice %63 {offsets = [0, 384], sizes = [8, 128], strides = [1, 1]} : vector<8x512xf32> to vector<8x128xf32>
    %73 = arith.mulf %70, %52 : vector<8x128xf32>
    %74 = arith.mulf %69, %72 : vector<8x128xf32>
    %75 = arith.addf %73, %74 : vector<8x128xf32>
    %76 = math.tanh %75 : vector<8x128xf32>
    %77 = arith.mulf %71, %76 : vector<8x128xf32>
    %c3_i32 = arith.constant 3 : i32
    %c8_i32_29 = arith.constant 8 : i32
    %78 = arith.muli %c3_i32, %c8_i32_29 : i32
    %79 = tpu.assume_multiple %78, 8 : i32
    %80 = arith.index_cast %79 : i32 to index
    %c0_30 = arith.constant 0 : index
    %81 = vector.load %arg8[%80, %c0_30] : memref<64x512xf32, #tpu.memory_space<vmem>>, vector<8x512xf32>
    %82 = arith.truncf %77 : vector<8x128xf32> to vector<8x128xbf16>
    %c0_31 = arith.constant 0 : index
    %c0_32 = arith.constant 0 : index
    %83 = vector.load %arg3[%c0_31, %c0_32] : memref<128x512xbf16, #tpu.memory_space<vmem>>, vector<128x512xbf16>
    %cst_33 = arith.constant dense<0.000000e+00> : vector<8x512xf32>
    %84 = tpu.matmul %82, %83, %cst_33 {dimension_numbers = #tpu.dot_dimension_numbers<[1], [0], [0], [1], [0, 0, 1, 1], [], []>} : vector<8x128xbf16>, vector<128x512xbf16>, vector<8x512xf32> -> vector<8x512xf32>
    %85 = arith.addf %81, %84 : vector<8x512xf32>
    %86 = math.tanh %85 : vector<8x512xf32>
    %87 = vector.extract_strided_slice %86 {offsets = [0, 0], sizes = [8, 384], strides = [1, 1]} : vector<8x512xf32> to vector<8x384xf32>
    %cst_34 = arith.constant 5.000000e-01 : f32
    %88 = vector.broadcast %cst_34 : f32 to vector<8x384xf32>
    %89 = arith.mulf %88, %87 : vector<8x384xf32>
    %cst_35 = arith.constant 5.000000e-01 : f32
    %90 = vector.broadcast %cst_35 : f32 to vector<8x384xf32>
    %91 = arith.addf %89, %90 : vector<8x384xf32>
    %92 = vector.extract_strided_slice %91 {offsets = [0, 0], sizes = [8, 128], strides = [1, 1]} : vector<8x384xf32> to vector<8x128xf32>
    %93 = vector.extract_strided_slice %91 {offsets = [0, 128], sizes = [8, 128], strides = [1, 1]} : vector<8x384xf32> to vector<8x128xf32>
    %94 = vector.extract_strided_slice %91 {offsets = [0, 256], sizes = [8, 128], strides = [1, 1]} : vector<8x384xf32> to vector<8x128xf32>
    %95 = vector.extract_strided_slice %86 {offsets = [0, 384], sizes = [8, 128], strides = [1, 1]} : vector<8x512xf32> to vector<8x128xf32>
    %96 = arith.mulf %93, %75 : vector<8x128xf32>
    %97 = arith.mulf %92, %95 : vector<8x128xf32>
    %98 = arith.addf %96, %97 : vector<8x128xf32>
    %99 = math.tanh %98 : vector<8x128xf32>
    %100 = arith.mulf %94, %99 : vector<8x128xf32>
    %c4_i32 = arith.constant 4 : i32
    %c8_i32_36 = arith.constant 8 : i32
    %101 = arith.muli %c4_i32, %c8_i32_36 : i32
    %102 = tpu.assume_multiple %101, 8 : i32
    %103 = arith.index_cast %102 : i32 to index
    %c0_37 = arith.constant 0 : index
    %104 = vector.load %arg8[%103, %c0_37] : memref<64x512xf32, #tpu.memory_space<vmem>>, vector<8x512xf32>
    %105 = arith.truncf %100 : vector<8x128xf32> to vector<8x128xbf16>
    %c0_38 = arith.constant 0 : index
    %c0_39 = arith.constant 0 : index
    %106 = vector.load %arg3[%c0_38, %c0_39] : memref<128x512xbf16, #tpu.memory_space<vmem>>, vector<128x512xbf16>
    %cst_40 = arith.constant dense<0.000000e+00> : vector<8x512xf32>
    %107 = tpu.matmul %105, %106, %cst_40 {dimension_numbers = #tpu.dot_dimension_numbers<[1], [0], [0], [1], [0, 0, 1, 1], [], []>} : vector<8x128xbf16>, vector<128x512xbf16>, vector<8x512xf32> -> vector<8x512xf32>
    %108 = arith.addf %104, %107 : vector<8x512xf32>
    %109 = math.tanh %108 : vector<8x512xf32>
    %110 = vector.extract_strided_slice %109 {offsets = [0, 0], sizes = [8, 384], strides = [1, 1]} : vector<8x512xf32> to vector<8x384xf32>
    %cst_41 = arith.constant 5.000000e-01 : f32
    %111 = vector.broadcast %cst_41 : f32 to vector<8x384xf32>
    %112 = arith.mulf %111, %110 : vector<8x384xf32>
    %cst_42 = arith.constant 5.000000e-01 : f32
    %113 = vector.broadcast %cst_42 : f32 to vector<8x384xf32>
    %114 = arith.addf %112, %113 : vector<8x384xf32>
    %115 = vector.extract_strided_slice %114 {offsets = [0, 0], sizes = [8, 128], strides = [1, 1]} : vector<8x384xf32> to vector<8x128xf32>
    %116 = vector.extract_strided_slice %114 {offsets = [0, 128], sizes = [8, 128], strides = [1, 1]} : vector<8x384xf32> to vector<8x128xf32>
    %117 = vector.extract_strided_slice %114 {offsets = [0, 256], sizes = [8, 128], strides = [1, 1]} : vector<8x384xf32> to vector<8x128xf32>
    %118 = vector.extract_strided_slice %109 {offsets = [0, 384], sizes = [8, 128], strides = [1, 1]} : vector<8x512xf32> to vector<8x128xf32>
    %119 = arith.mulf %116, %98 : vector<8x128xf32>
    %120 = arith.mulf %115, %118 : vector<8x128xf32>
    %121 = arith.addf %119, %120 : vector<8x128xf32>
    %122 = math.tanh %121 : vector<8x128xf32>
    %123 = arith.mulf %117, %122 : vector<8x128xf32>
    %c5_i32 = arith.constant 5 : i32
    %c8_i32_43 = arith.constant 8 : i32
    %124 = arith.muli %c5_i32, %c8_i32_43 : i32
    %125 = tpu.assume_multiple %124, 8 : i32
    %126 = arith.index_cast %125 : i32 to index
    %c0_44 = arith.constant 0 : index
    %127 = vector.load %arg8[%126, %c0_44] : memref<64x512xf32, #tpu.memory_space<vmem>>, vector<8x512xf32>
    %128 = arith.truncf %123 : vector<8x128xf32> to vector<8x128xbf16>
    %c0_45 = arith.constant 0 : index
    %c0_46 = arith.constant 0 : index
    %129 = vector.load %arg3[%c0_45, %c0_46] : memref<128x512xbf16, #tpu.memory_space<vmem>>, vector<128x512xbf16>
    %cst_47 = arith.constant dense<0.000000e+00> : vector<8x512xf32>
    %130 = tpu.matmul %128, %129, %cst_47 {dimension_numbers = #tpu.dot_dimension_numbers<[1], [0], [0], [1], [0, 0, 1, 1], [], []>} : vector<8x128xbf16>, vector<128x512xbf16>, vector<8x512xf32> -> vector<8x512xf32>
    %131 = arith.addf %127, %130 : vector<8x512xf32>
    %132 = math.tanh %131 : vector<8x512xf32>
    %133 = vector.extract_strided_slice %132 {offsets = [0, 0], sizes = [8, 384], strides = [1, 1]} : vector<8x512xf32> to vector<8x384xf32>
    %cst_48 = arith.constant 5.000000e-01 : f32
    %134 = vector.broadcast %cst_48 : f32 to vector<8x384xf32>
    %135 = arith.mulf %134, %133 : vector<8x384xf32>
    %cst_49 = arith.constant 5.000000e-01 : f32
    %136 = vector.broadcast %cst_49 : f32 to vector<8x384xf32>
    %137 = arith.addf %135, %136 : vector<8x384xf32>
    %138 = vector.extract_strided_slice %137 {offsets = [0, 0], sizes = [8, 128], strides = [1, 1]} : vector<8x384xf32> to vector<8x128xf32>
    %139 = vector.extract_strided_slice %137 {offsets = [0, 128], sizes = [8, 128], strides = [1, 1]} : vector<8x384xf32> to vector<8x128xf32>
    %140 = vector.extract_strided_slice %137 {offsets = [0, 256], sizes = [8, 128], strides = [1, 1]} : vector<8x384xf32> to vector<8x128xf32>
    %141 = vector.extract_strided_slice %132 {offsets = [0, 384], sizes = [8, 128], strides = [1, 1]} : vector<8x512xf32> to vector<8x128xf32>
    %142 = arith.mulf %139, %121 : vector<8x128xf32>
    %143 = arith.mulf %138, %141 : vector<8x128xf32>
    %144 = arith.addf %142, %143 : vector<8x128xf32>
    %145 = math.tanh %144 : vector<8x128xf32>
    %146 = arith.mulf %140, %145 : vector<8x128xf32>
    %c6_i32 = arith.constant 6 : i32
    %c8_i32_50 = arith.constant 8 : i32
    %147 = arith.muli %c6_i32, %c8_i32_50 : i32
    %148 = tpu.assume_multiple %147, 8 : i32
    %149 = arith.index_cast %148 : i32 to index
    %c0_51 = arith.constant 0 : index
    %150 = vector.load %arg8[%149, %c0_51] : memref<64x512xf32, #tpu.memory_space<vmem>>, vector<8x512xf32>
    %151 = arith.truncf %146 : vector<8x128xf32> to vector<8x128xbf16>
    %c0_52 = arith.constant 0 : index
    %c0_53 = arith.constant 0 : index
    %152 = vector.load %arg3[%c0_52, %c0_53] : memref<128x512xbf16, #tpu.memory_space<vmem>>, vector<128x512xbf16>
    %cst_54 = arith.constant dense<0.000000e+00> : vector<8x512xf32>
    %153 = tpu.matmul %151, %152, %cst_54 {dimension_numbers = #tpu.dot_dimension_numbers<[1], [0], [0], [1], [0, 0, 1, 1], [], []>} : vector<8x128xbf16>, vector<128x512xbf16>, vector<8x512xf32> -> vector<8x512xf32>
    %154 = arith.addf %150, %153 : vector<8x512xf32>
    %155 = math.tanh %154 : vector<8x512xf32>
    %156 = vector.extract_strided_slice %155 {offsets = [0, 0], sizes = [8, 384], strides = [1, 1]} : vector<8x512xf32> to vector<8x384xf32>
    %cst_55 = arith.constant 5.000000e-01 : f32
    %157 = vector.broadcast %cst_55 : f32 to vector<8x384xf32>
    %158 = arith.mulf %157, %156 : vector<8x384xf32>
    %cst_56 = arith.constant 5.000000e-01 : f32
    %159 = vector.broadcast %cst_56 : f32 to vector<8x384xf32>
    %160 = arith.addf %158, %159 : vector<8x384xf32>
    %161 = vector.extract_strided_slice %160 {offsets = [0, 0], sizes = [8, 128], strides = [1, 1]} : vector<8x384xf32> to vector<8x128xf32>
    %162 = vector.extract_strided_slice %160 {offsets = [0, 128], sizes = [8, 128], strides = [1, 1]} : vector<8x384xf32> to vector<8x128xf32>
    %163 = vector.extract_strided_slice %160 {offsets = [0, 256], sizes = [8, 128], strides = [1, 1]} : vector<8x384xf32> to vector<8x128xf32>
    %164 = vector.extract_strided_slice %155 {offsets = [0, 384], sizes = [8, 128], strides = [1, 1]} : vector<8x512xf32> to vector<8x128xf32>
    %165 = arith.mulf %162, %144 : vector<8x128xf32>
    %166 = arith.mulf %161, %164 : vector<8x128xf32>
    %167 = arith.addf %165, %166 : vector<8x128xf32>
    %168 = math.tanh %167 : vector<8x128xf32>
    %169 = arith.mulf %163, %168 : vector<8x128xf32>
    %c7_i32 = arith.constant 7 : i32
    %c8_i32_57 = arith.constant 8 : i32
    %170 = arith.muli %c7_i32, %c8_i32_57 : i32
    %171 = tpu.assume_multiple %170, 8 : i32
    %172 = arith.index_cast %171 : i32 to index
    %c0_58 = arith.constant 0 : index
    %173 = vector.load %arg8[%172, %c0_58] : memref<64x512xf32, #tpu.memory_space<vmem>>, vector<8x512xf32>
    %174 = arith.truncf %169 : vector<8x128xf32> to vector<8x128xbf16>
    %c0_59 = arith.constant 0 : index
    %c0_60 = arith.constant 0 : index
    %175 = vector.load %arg3[%c0_59, %c0_60] : memref<128x512xbf16, #tpu.memory_space<vmem>>, vector<128x512xbf16>
    %cst_61 = arith.constant dense<0.000000e+00> : vector<8x512xf32>
    %176 = tpu.matmul %174, %175, %cst_61 {dimension_numbers = #tpu.dot_dimension_numbers<[1], [0], [0], [1], [0, 0, 1, 1], [], []>} : vector<8x128xbf16>, vector<128x512xbf16>, vector<8x512xf32> -> vector<8x512xf32>
    %177 = arith.addf %173, %176 : vector<8x512xf32>
    %178 = math.tanh %177 : vector<8x512xf32>
    %179 = vector.extract_strided_slice %178 {offsets = [0, 0], sizes = [8, 384], strides = [1, 1]} : vector<8x512xf32> to vector<8x384xf32>
    %cst_62 = arith.constant 5.000000e-01 : f32
    %180 = vector.broadcast %cst_62 : f32 to vector<8x384xf32>
    %181 = arith.mulf %180, %179 : vector<8x384xf32>
    %cst_63 = arith.constant 5.000000e-01 : f32
    %182 = vector.broadcast %cst_63 : f32 to vector<8x384xf32>
    %183 = arith.addf %181, %182 : vector<8x384xf32>
    %184 = vector.extract_strided_slice %183 {offsets = [0, 0], sizes = [8, 128], strides = [1, 1]} : vector<8x384xf32> to vector<8x128xf32>
    %185 = vector.extract_strided_slice %183 {offsets = [0, 128], sizes = [8, 128], strides = [1, 1]} : vector<8x384xf32> to vector<8x128xf32>
    %186 = vector.extract_strided_slice %183 {offsets = [0, 256], sizes = [8, 128], strides = [1, 1]} : vector<8x384xf32> to vector<8x128xf32>
    %187 = vector.extract_strided_slice %178 {offsets = [0, 384], sizes = [8, 128], strides = [1, 1]} : vector<8x512xf32> to vector<8x128xf32>
    %188 = arith.mulf %185, %167 : vector<8x128xf32>
    %189 = arith.mulf %184, %187 : vector<8x128xf32>
    %190 = arith.addf %188, %189 : vector<8x128xf32>
    %191 = math.tanh %190 : vector<8x128xf32>
    %192 = arith.mulf %186, %191 : vector<8x128xf32>
    %c8_i32_64 = arith.constant 8 : i32
    %193 = arith.truncf %192 : vector<8x128xf32> to vector<8x128xbf16>
    %c0_65 = arith.constant 0 : index
    %c0_66 = arith.constant 0 : index
    %194 = vector.load %arg5[%c0_65, %c0_66] : memref<128x128xbf16, #tpu.memory_space<vmem>>, vector<128x128xbf16>
    %cst_67 = arith.constant dense<0.000000e+00> : vector<8x128xf32>
    %195 = tpu.matmul %193, %194, %cst_67 {dimension_numbers = #tpu.dot_dimension_numbers<[1], [0], [0], [1], [0, 0, 1, 1], [], []>} : vector<8x128xbf16>, vector<128x128xbf16>, vector<8x128xf32> -> vector<8x128xf32>
    %c0_68 = arith.constant 0 : index
    %c0_69 = arith.constant 0 : index
    %196 = vector.load %arg6[%c0_68, %c0_69] : memref<1x128xf32, #tpu.memory_space<vmem>>, vector<1x128xf32>
    %197 = vector.broadcast %196 : vector<1x128xf32> to vector<8x128xf32>
    %198 = arith.addf %195, %197 : vector<8x128xf32>
    %c0_70 = arith.constant 0 : index
    %c0_71 = arith.constant 0 : index
    %199 = vector.load %arg7[%c0_70, %c0_71] : memref<8x128xf32, #tpu.memory_space<vmem>>, vector<8x128xf32>
    tpu.vector_store %arg7[%c0_70, %c0_71], %198 {strides = array<i32>} : memref<8x128xf32, #tpu.memory_space<vmem>>, vector<8x128xf32>,
    return
  }
  func.func @transform_0(%arg0: i32) -> (i32, i32) {
    %c0_i32 = arith.constant 0 : i32
    %c0_i32_0 = arith.constant 0 : i32
    %c0_i32_1 = arith.constant 0 : i32
    return %c0_i32, %c0_i32_0 : i32, i32
  }
  func.func @transform_1(%arg0: i32) -> (i32, i32) {
    %c0_i32 = arith.constant 0 : i32
    %c0_i32_0 = arith.constant 0 : i32
    %c0_i32_1 = arith.constant 0 : i32
    return %c0_i32, %c0_i32_0 : i32, i32
  }
  func.func @transform_2(%arg0: i32) -> (i32, i32) {
    %c0_i32 = arith.constant 0 : i32
    %c0_i32_0 = arith.constant 0 : i32
    %c0_i32_1 = arith.constant 0 : i32
    return %c0_i32, %c0_i32_0 : i32, i32
  }
  func.func @transform_3(%arg0: i32) -> (i32, i32) {
    %c0_i32 = arith.constant 0 : i32
    %c0_i32_0 = arith.constant 0 : i32
    %c0_i32_1 = arith.constant 0 : i32
    return %c0_i32, %c0_i32_0 : i32, i32
  }
  func.func @transform_4(%arg0: i32) -> (i32, i32) {
    %c0_i32 = arith.constant 0 : i32
    %c0_i32_0 = arith.constant 0 : i32
    %c0_i32_1 = arith.constant 0 : i32
    return %c0_i32, %c0_i32_0 : i32, i32
  }
  func.func @transform_5(%arg0: i32) -> (i32, i32) {
    %c0_i32 = arith.constant 0 : i32
    %c0_i32_0 = arith.constant 0 : i32
    %c0_i32_1 = arith.constant 0 : i32
    return %c0_i32, %c0_i32_0 : i32, i32
  }
  func.func @transform_6(%arg0: i32) -> (i32, i32) {
    %c0_i32 = arith.constant 0 : i32
    %c0_i32_0 = arith.constant 0 : i32
    %c0_i32_1 = arith.constant 0 : i32
    return %c0_i32, %c0_i32_0 : i32, i32
  }
}

</mosaic_0001>

<llo_original>
// kernel: lstm_model_forward.1
$region0: #{lstm_model_forward.1}
  #allocation0 [shape = 'u32[]', space=smem, size = 0x4, offset = 0x4, fixed_abs, tag = 'smem constant byte address 0x4 - core index']
  #allocation1 [shape = 'u32[144,128]{1,0:T(1,128)}', space=vmem, size = 0x12000, scoped, tag = 'internal scratch']
  #allocation2 [shape = 'f32[64,512]{1,0:T(8,128)}', space=vmem, size = 0x20000, scoped, tag = 'scratch operand']
  %s0 = inlined_call_operand.vmem [shape: bf16[64,16], index: 0, kind: input, shape index: {}]
  %s1 = inlined_call_operand.hbm [shape: bf16[16,512], index: 1, kind: input, shape index: {}]
  %s2 = inlined_call_operand.hbm [shape: bf16[128,512], index: 2, kind: input, shape index: {}]
  %s3 = inlined_call_operand.vmem [shape: f32[1,512], index: 3, kind: input, shape index: {}]
  %s4 = inlined_call_operand.vmem [shape: bf16[128,128], index: 4, kind: input, shape index: {}]
  %s5 = inlined_call_operand.vmem [shape: f32[1,128], index: 5, kind: input, shape index: {}]
  %s6 = inlined_call_operand.vmem [shape: f32[8,128], index: 6, kind: output, shape index: {}]
  %s7 = sld [smem:[#allocation0]]
  $region42: #{lstm_model_forward.1} parent=0
    _
  %s9 = ssub.s32 1, %s7
  %s10 = scalar_select 0, %s9, %s7
  $region1: #{lstm_model_forward.1} parent=0
    #allocation3 [shape = 'u8[16384]{0}', space=vmem, size = 0x4000, scoped, tag = 'input window, operand 1, single buffered']
    #allocation4 [shape = 's32[1]{0}', space=sflag, size = 0x4, scoped, tag = 'scoped memory for lstm_model_forward.1']
    #allocation5 [shape = 'u8[131072]{0}', space=vmem, size = 0x20000, scoped, tag = 'input window, operand 2, single buffered']
    #allocation6 [shape = 's32[1]{0}', space=sflag, size = 0x4, scoped, tag = 'scoped memory for lstm_model_forward.1']
    %11 = vsyncpa [#allocation4], 0
    %12 = vsyncpa [#allocation6], 0
    // Predicated region
    $region2: #{lstm_model_forward.1} parent=1 // pred_check
      _
    $region3: #{lstm_model_forward.1} parent=1 // pred_check_branch
      %14 = sbr.rel (0) target = $region5
    $region4: #{lstm_model_forward.1} parent=1 // pred_region
      _
    $region5: #{lstm_model_forward.1} parent=1 // pred_fallthru
      _
    // Predicated region
    $region6: #{lstm_model_forward.1} parent=1 // pred_check
      _
    $region7: #{lstm_model_forward.1} parent=1 // pred_check_branch
      %16 = sbr.rel (0) target = $region9
    $region8: #{lstm_model_forward.1} parent=1 // pred_region
      %s18 = ssub.s32 512, 512
      %19 = vsyncadd [#allocation4], %s18
      %s20 = sshll.u32 [#allocation3], 4
      %s21 = int_to_ptr.vmem [resolvable:$true] %s20
      %26 = dma.hbm_to_vmem [thread:$0]  %s1, 512, %s21, [#allocation4], 256, 256, 16
    $region9: #{lstm_model_forward.1} parent=1 // pred_fallthru
      _
    // Predicated region
    $region10: #{lstm_model_forward.1} parent=1 // pred_check
      _
    $region11: #{lstm_model_forward.1} parent=1 // pred_check_branch
      %28 = sbr.rel (0) target = $region13
    $region12: #{lstm_model_forward.1} parent=1 // pred_region
      %s30 = ssub.s32 4096, 4096
      %31 = vsyncadd [#allocation6], %s30
      %s32 = sshll.u32 [#allocation5], 4
      %s33 = int_to_ptr.vmem [resolvable:$true] %s32
      %38 = dma.hbm_to_vmem [thread:$0]  %s2, 4096, %s33, [#allocation6], 256, 256, 16
    $region13: #{lstm_model_forward.1} parent=1 // pred_fallthru
      _
    // Predicated region
    $region14: #{lstm_model_forward.1} parent=1 // pred_check
      _
    $region15: #{lstm_model_forward.1} parent=1 // pred_check_branch
      %40 = sbr.rel (0) target = $region17
    $region16: #{lstm_model_forward.1} parent=1 // pred_region
      _
    $region17: #{lstm_model_forward.1} parent=1 // pred_fallthru
      _
    // Predicated region
    $region18: #{lstm_model_forward.1} parent=1 // pred_check
      _
    $region19: #{lstm_model_forward.1} parent=1 // pred_check_branch
      %42 = sbr.rel (0) target = $region21
    $region20: #{lstm_model_forward.1} parent=1 // pred_region
      _
    $region21: #{lstm_model_forward.1} parent=1 // pred_fallthru
      _
    // Predicated region
    $region22: #{lstm_model_forward.1} parent=1 // pred_check
      _
    $region23: #{lstm_model_forward.1} parent=1 // pred_check_branch
      %44 = sbr.rel (0) target = $region25
    $region24: #{lstm_model_forward.1} parent=1 // pred_region
      _
    $region25: #{lstm_model_forward.1} parent=1 // pred_fallthru
      _
    // Predicated region
    $region26: #{lstm_model_forward.1} parent=1 // pred_check
      _
    $region27: #{lstm_model_forward.1} parent=1 // pred_check_branch
      %46 = sbr.rel (0) target = $region29
    $region28: #{lstm_model_forward.1} parent=1 // pred_region
      %47 = dma.done [#allocation4], 512
    $region29: #{lstm_model_forward.1} parent=1 // pred_fallthru
      _
    // Predicated region
    $region30: #{lstm_model_forward.1} parent=1 // pred_check
      _
    $region31: #{lstm_model_forward.1} parent=1 // pred_check_branch
      %49 = sbr.rel (0) target = $region33
    $region32: #{lstm_model_forward.1} parent=1 // pred_region
      %50 = dma.done [#allocation6], 4096
    $region33: #{lstm_model_forward.1} parent=1 // pred_fallthru
      _
    %v52 = vld [vmem:[%s0] sm:$0xf]
    %v53 = vld [vmem:[%s0 + $0x4] sm:$0xf]
    %v54 = vld [vmem:[%s0 + $0x8] sm:$0xf]
    %v55 = vld [vmem:[%s0 + $0xc] sm:$0xf]
    %v56 = vld [vmem:[%s0 + $0x10] sm:$0xf]
    %v57 = vld [vmem:[%s0 + $0x14] sm:$0xf]
    %v58 = vld [vmem:[%s0 + $0x18] sm:$0xf]
    %v59 = vld [vmem:[%s0 + $0x1c] sm:$0xf]
    %v60 = vld [vmem:[#allocation3] sm:$0xff]
    %v61 = vld [vmem:[#allocation3 + $0x8] sm:$0xff]
    %v62 = vld [vmem:[#allocation3 + $0x10] sm:$0xff]
    %v63 = vld [vmem:[#allocation3 + $0x18] sm:$0xff]
    %v64 = vld [vmem:[%s3] sm:$0xf]
    %v66 = vlaneseq
    %v67 = vshrl.u32 %v66, 7
    %v68 = vsub.s32 0, %v67
    %v69 = vrot.slane %v64, %v68
    %v70 = vlaneseq
    %v71 = vshrl.u32 %v70, 7
    %v72 = vsub.s32 1, %v71
    %v73 = vrot.slane %v64, %v72
    %v74 = vlaneseq
    %v75 = vshrl.u32 %v74, 7
    %v76 = vsub.s32 2, %v75
    %v77 = vrot.slane %v64, %v76
    %v78 = vlaneseq
    %v79 = vshrl.u32 %v78, 7
    %v80 = vsub.s32 3, %v79
    %v81 = vrot.slane %v64, %v80
    %v94 = vunpack.c.l.b16 %v52
    %v95 = vunpack.c.l.b16 %v53
    %v96 = vunpack.c.l.b16 %v54
    %v97 = vunpack.c.l.b16 %v55
    %v98 = vunpack.c.l.b16 %v56
    %v99 = vunpack.c.l.b16 %v57
    %v100 = vunpack.c.l.b16 %v58
    %v101 = vunpack.c.l.b16 %v59
    %v102 = vpack.c.b16 %v95, %v94
    %v103 = vpack.c.b16 %v97, %v96
    %v104 = vpack.c.b16 %v99, %v98
    %v105 = vpack.c.b16 %v101, %v100
    %v110 = vunpack.c.l.b16 %v60
    %v111 = vunpack.c.h.b16 %v60
    %v112 = vunpack.c.l.b16 %v61
    %v113 = vunpack.c.h.b16 %v61
    %v114 = vunpack.c.l.b16 %v62
    %v115 = vunpack.c.h.b16 %v62
    %v116 = vunpack.c.l.b16 %v63
    %v117 = vunpack.c.h.b16 %v63
    %v118 = vpack.c.b16 %v114, %v110
    %v119 = vpack.c.b16 %v115, %v111
    %v120 = vpack.c.b16 %v116, %v112
    %v121 = vpack.c.b16 %v117, %v113
    %vm126 = vcmask 130048
    %v128 = vsel %vm126, %v102, 0
    %v131 = vsel %vm126, %v103, 0
    %v134 = vsel %vm126, %v104, 0
    %v137 = vsel %vm126, %v105, 0
    %139 = vmatprep.subr.bf16.mxu0 %v119
    %140 = vmatpush1.bf16.msra.mxu0 %v118
    %141 = vmatprep.subr.bf16.mxu0 0
    %142 = vmatpush1.bf16.msra.mxu0 0
    %143 = vmatprep.subr.bf16.mxu0 0
    %144 = vmatpush1.bf16.msra.mxu0 0
    %145 = vmatprep.subr.bf16.mxu0 0
    %146 = vmatpush1.bf16.msra.mxu0 0
    %147 = vmatprep.subr.bf16.mxu0 0
    %148 = vmatpush1.bf16.msra.mxu0 0
    %149 = vmatprep.subr.bf16.mxu0 0
    %150 = vmatpush1.bf16.msra.mxu0 0
    %151 = vmatprep.subr.bf16.mxu0 0
    %152 = vmatpush1.bf16.msra.mxu0 0
    %153 = vmatprep.subr.bf16.mxu0 0
    %154 = vmatpush1.bf16.msra.mxu0 0
    %155 = vmatprep.subr.bf16.mxu0 0
    %156 = vmatpush1.bf16.msra.mxu0 0
    %157 = vmatprep.subr.bf16.mxu0 0
    %158 = vmatpush1.bf16.msra.mxu0 0
    %159 = vmatprep.subr.bf16.mxu0 0
    %160 = vmatpush1.bf16.msra.mxu0 0
    %161 = vmatprep.subr.bf16.mxu0 0
    %162 = vmatpush1.bf16.msra.mxu0 0
    %163 = vmatprep.subr.bf16.mxu0 0
    %164 = vmatpush1.bf16.msra.mxu0 0
    %165 = vmatprep.subr.bf16.mxu0 0
    %166 = vmatpush1.bf16.msra.mxu0 0
    %167 = vmatprep.subr.bf16.mxu0 0
    %168 = vmatpush1.bf16.msra.mxu0 0
    %169 = vmatprep.subr.bf16.mxu0 0
    %170 = vmatpush1.bf16.msra.mxu0 0
    %171 = vmatprep.mubr.bf16.mxu0 0
    %172 = vmatmul.mubr.bf16.gmra.mrb[0].mxu0 %v128
    %v173 = vpop.f32.mrb[0].mxu0
    %v174 = vadd.f32 %v69, %v173
    %v175 = vpop.f32.mrb[0].mxu0
    %v176 = vadd.f32 %v73, %v175
    %v177 = vpop.f32.mrb[0].mxu0
    %v178 = vadd.f32 %v69, %v177
    %v179 = vpop.f32.mrb[0].mxu0
    %v180 = vadd.f32 %v73, %v179
    %181 = vmatprep.mubr.bf16.mxu0 0
    %182 = vmatmul.mubr.bf16.gmra.mrb[0].mxu0 %v131
    %v183 = vpop.f32.mrb[0].mxu0
    %v184 = vadd.f32 %v69, %v183
    %v185 = vpop.f32.mrb[0].mxu0
    %v186 = vadd.f32 %v73, %v185
    %v187 = vpop.f32.mrb[0].mxu0
    %v188 = vadd.f32 %v69, %v187
    %v189 = vpop.f32.mrb[0].mxu0
    %v190 = vadd.f32 %v73, %v189
    %191 = vmatprep.mubr.bf16.mxu0 0
    %192 = vmatmul.mubr.bf16.gmra.mrb[0].mxu0 %v134
    %v193 = vpop.f32.mrb[0].mxu0
    %v194 = vadd.f32 %v69, %v193
    %v195 = vpop.f32.mrb[0].mxu0
    %v196 = vadd.f32 %v73, %v195
    %v197 = vpop.f32.mrb[0].mxu0
    %v198 = vadd.f32 %v69, %v197
    %v199 = vpop.f32.mrb[0].mxu0
    %v200 = vadd.f32 %v73, %v199
    %201 = vmatprep.mubr.bf16.mxu0 0
    %202 = vmatmul.mubr.bf16.gmra.mrb[0].mxu0 %v137
    %v203 = vpop.f32.mrb[0].mxu0
    %v204 = vadd.f32 %v69, %v203
    %v205 = vpop.f32.mrb[0].mxu0
    %v206 = vadd.f32 %v73, %v205
    %v207 = vpop.f32.mrb[0].mxu0
    %v208 = vadd.f32 %v69, %v207
    %v209 = vpop.f32.mrb[0].mxu0
    %v210 = vadd.f32 %v73, %v209
    %211 = vdwg.mxu0
    %212 = vmatprep.subr.bf16.mxu0 %v121
    %213 = vmatpush1.bf16.msra.mxu0 %v120
    %214 = vmatprep.subr.bf16.mxu0 0
    %215 = vmatpush1.bf16.msra.mxu0 0
    %216 = vmatprep.subr.bf16.mxu0 0
    %217 = vmatpush1.bf16.msra.mxu0 0
    %218 = vmatprep.subr.bf16.mxu0 0
    %219 = vmatpush1.bf16.msra.mxu0 0
    %220 = vmatprep.subr.bf16.mxu0 0
    %221 = vmatpush1.bf16.msra.mxu0 0
    %222 = vmatprep.subr.bf16.mxu0 0
    %223 = vmatpush1.bf16.msra.mxu0 0
    %224 = vmatprep.subr.bf16.mxu0 0
    %225 = vmatpush1.bf16.msra.mxu0 0
    %226 = vmatprep.subr.bf16.mxu0 0
    %227 = vmatpush1.bf16.msra.mxu0 0
    %228 = vmatprep.subr.bf16.mxu0 0
    %229 = vmatpush1.bf16.msra.mxu0 0
    %230 = vmatprep.subr.bf16.mxu0 0
    %231 = vmatpush1.bf16.msra.mxu0 0
    %232 = vmatprep.subr.bf16.mxu0 0
    %233 = vmatpush1.bf16.msra.mxu0 0
    %234 = vmatprep.subr.bf16.mxu0 0
    %235 = vmatpush1.bf16.msra.mxu0 0
    %236 = vmatprep.subr.bf16.mxu0 0
    %237 = vmatpush1.bf16.msra.mxu0 0
    %238 = vmatprep.subr.bf16.mxu0 0
    %239 = vmatpush1.bf16.msra.mxu0 0
    %240 = vmatprep.subr.bf16.mxu0 0
    %241 = vmatpush1.bf16.msra.mxu0 0
    %242 = vmatprep.subr.bf16.mxu0 0
    %243 = vmatpush1.bf16.msra.mxu0 0
    %244 = vmatprep.mubr.bf16.mxu0 0
    %245 = vmatmul.mubr.bf16.gmra.mrb[0].mxu0 %v128
    %v246 = vpop.f32.mrb[0].mxu0
    %v247 = vadd.f32 %v77, %v246
    %v248 = vpop.f32.mrb[0].mxu0
    %v249 = vadd.f32 %v81, %v248
    %v250 = vpop.f32.mrb[0].mxu0
    %v251 = vadd.f32 %v77, %v250
    %v252 = vpop.f32.mrb[0].mxu0
    %v253 = vadd.f32 %v81, %v252
    %254 = vmatprep.mubr.bf16.mxu0 0
    %255 = vmatmul.mubr.bf16.gmra.mrb[0].mxu0 %v131
    %v256 = vpop.f32.mrb[0].mxu0
    %v257 = vadd.f32 %v77, %v256
    %v258 = vpop.f32.mrb[0].mxu0
    %v259 = vadd.f32 %v81, %v258
    %v260 = vpop.f32.mrb[0].mxu0
    %v261 = vadd.f32 %v77, %v260
    %v262 = vpop.f32.mrb[0].mxu0
    %v263 = vadd.f32 %v81, %v262
    %264 = vmatprep.mubr.bf16.mxu0 0
    %265 = vmatmul.mubr.bf16.gmra.mrb[0].mxu0 %v134
    %v266 = vpop.f32.mrb[0].mxu0
    %v267 = vadd.f32 %v77, %v266
    %v268 = vpop.f32.mrb[0].mxu0
    %v269 = vadd.f32 %v81, %v268
    %v270 = vpop.f32.mrb[0].mxu0
    %v271 = vadd.f32 %v77, %v270
    %v272 = vpop.f32.mrb[0].mxu0
    %v273 = vadd.f32 %v81, %v272
    %274 = vmatprep.mubr.bf16.mxu0 0
    %275 = vmatmul.mubr.bf16.gmra.mrb[0].mxu0 %v137
    %v276 = vpop.f32.mrb[0].mxu0
    %v277 = vadd.f32 %v77, %v276
    %v278 = vpop.f32.mrb[0].mxu0
    %v279 = vadd.f32 %v81, %v278
    %v280 = vpop.f32.mrb[0].mxu0
    %v281 = vadd.f32 %v77, %v280
    %v282 = vpop.f32.mrb[0].mxu0
    %v283 = vadd.f32 %v81, %v282
    %284 = vdwg.mxu0
    %285 = vst [vmem:[#allocation2] sm:$0xff] %v174
    %286 = vst [vmem:[#allocation2 + $0x8] sm:$0xff] %v176
    %287 = vst [vmem:[#allocation2 + $0x10] sm:$0xff] %v247
    %288 = vst [vmem:[#allocation2 + $0x18] sm:$0xff] %v249
    %289 = vst [vmem:[#allocation2 + $0x20] sm:$0xff] %v178
    %290 = vst [vmem:[#allocation2 + $0x28] sm:$0xff] %v180
    %291 = vst [vmem:[#allocation2 + $0x30] sm:$0xff] %v251
    %292 = vst [vmem:[#allocation2 + $0x38] sm:$0xff] %v253
    %293 = vst [vmem:[#allocation2 + $0x40] sm:$0xff] %v184
    %294 = vst [vmem:[#allocation2 + $0x48] sm:$0xff] %v186
    %295 = vst [vmem:[#allocation2 + $0x50] sm:$0xff] %v257
    %296 = vst [vmem:[#allocation2 + $0x58] sm:$0xff] %v259
    %297 = vst [vmem:[#allocation2 + $0x60] sm:$0xff] %v188
    %298 = vst [vmem:[#allocation2 + $0x68] sm:$0xff] %v190
    %299 = vst [vmem:[#allocation2 + $0x70] sm:$0xff] %v261
    %300 = vst [vmem:[#allocation2 + $0x78] sm:$0xff] %v263
    %301 = vst [vmem:[#allocation2 + $0x80] sm:$0xff] %v194
    %302 = vst [vmem:[#allocation2 + $0x88] sm:$0xff] %v196
    %303 = vst [vmem:[#allocation2 + $0x90] sm:$0xff] %v267
    %304 = vst [vmem:[#allocation2 + $0x98] sm:$0xff] %v269
    %305 = vst [vmem:[#allocation2 + $0xa0] sm:$0xff] %v198
    %306 = vst [vmem:[#allocation2 + $0xa8] sm:$0xff] %v200
    %307 = vst [vmem:[#allocation2 + $0xb0] sm:$0xff] %v271
    %308 = vst [vmem:[#allocation2 + $0xb8] sm:$0xff] %v273
    %309 = vst [vmem:[#allocation2 + $0xc0] sm:$0xff] %v204
    %310 = vst [vmem:[#allocation2 + $0xc8] sm:$0xff] %v206
    %311 = vst [vmem:[#allocation2 + $0xd0] sm:$0xff] %v277
    %312 = vst [vmem:[#allocation2 + $0xd8] sm:$0xff] %v279
    %313 = vst [vmem:[#allocation2 + $0xe0] sm:$0xff] %v208
    %314 = vst [vmem:[#allocation2 + $0xe8] sm:$0xff] %v210
    %315 = vst [vmem:[#allocation2 + $0xf0] sm:$0xff] %v281
    %316 = vst [vmem:[#allocation2 + $0xf8] sm:$0xff] %v283
    %s317 = smul.u32 0, 4
    %s318 = smul.addr %s317, 8
    %s319 = scalar_lea.vmem [#allocation2], %s318
    %v320 = vld [vmem:[%s319] sm:$0xff]
    %v321 = vld [vmem:[%s319 + $0x8] sm:$0xff]
    %v322 = vld [vmem:[%s319 + $0x10] sm:$0xff]
    %v323 = vld [vmem:[%s319 + $0x18] sm:$0xff]
    %v324 = vld [vmem:[#allocation5] sm:$0xff]
    %v325 = vld [vmem:[#allocation5 + $0x8] sm:$0xff]
    %v326 = vld [vmem:[#allocation5 + $0x10] sm:$0xff]
    %v327 = vld [vmem:[#allocation5 + $0x18] sm:$0xff]
    %v328 = vld [vmem:[#allocation5 + $0x20] sm:$0xff]
    %v329 = vld [vmem:[#allocation5 + $0x28] sm:$0xff]
    %v330 = vld [vmem:[#allocation5 + $0x30] sm:$0xff]
    %v331 = vld [vmem:[#allocation5 + $0x38] sm:$0xff]
    %v332 = vld [vmem:[#allocation5 + $0x40] sm:$0xff]
    %v333 = vld [vmem:[#allocation5 + $0x48] sm:$0xff]
    %v334 = vld [vmem:[#allocation5 + $0x50] sm:$0xff]
    %v335 = vld [vmem:[#allocation5 + $0x58] sm:$0xff]
    %v336 = vld [vmem:[#allocation5 + $0x60] sm:$0xff]
    %v337 = vld [vmem:[#allocation5 + $0x68] sm:$0xff]
    %v338 = vld [vmem:[#allocation5 + $0x70] sm:$0xff]
    %v339 = vld [vmem:[#allocation5 + $0x78] sm:$0xff]
    %v340 = vld [vmem:[#allocation5 + $0x80] sm:$0xff]
    %v341 = vld [vmem:[#allocation5 + $0x88] sm:$0xff]
    %v342 = vld [vmem:[#allocation5 + $0x90] sm:$0xff]
    %v343 = vld [vmem:[#allocation5 + $0x98] sm:$0xff]
    %v344 = vld [vmem:[#allocation5 + $0xa0] sm:$0xff]
    %v345 = vld [vmem:[#allocation5 + $0xa8] sm:$0xff]
    %v346 = vld [vmem:[#allocation5 + $0xb0] sm:$0xff]
    %v347 = vld [vmem:[#allocation5 + $0xb8] sm:$0xff]
    %v348 = vld [vmem:[#allocation5 + $0xc0] sm:$0xff]
    %v349 = vld [vmem:[#allocation5 + $0xc8] sm:$0xff]
    %v350 = vld [vmem:[#allocation5 + $0xd0] sm:$0xff]
    %v351 = vld [vmem:[#allocation5 + $0xd8] sm:$0xff]
    %v352 = vld [vmem:[#allocation5 + $0xe0] sm:$0xff]
    %v353 = vld [vmem:[#allocation5 + $0xe8] sm:$0xff]
    %v354 = vld [vmem:[#allocation5 + $0xf0] sm:$0xff]
    %v355 = vld [vmem:[#allocation5 + $0xf8] sm:$0xff]
    %v388 = vunpack.c.l.b16 %v324
    %v389 = vunpack.c.h.b16 %v324
    %v390 = vunpack.c.l.b16 %v325
    %v391 = vunpack.c.h.b16 %v325
    %v392 = vunpack.c.l.b16 %v326
    %v393 = vunpack.c.h.b16 %v326
    %v394 = vunpack.c.l.b16 %v327
    %v395 = vunpack.c.h.b16 %v327
    %v396 = vunpack.c.l.b16 %v328
    %v397 = vunpack.c.h.b16 %v328
    %v398 = vunpack.c.l.b16 %v329
    %v399 = vunpack.c.h.b16 %v329
    %v400 = vunpack.c.l.b16 %v330
    %v401 = vunpack.c.h.b16 %v330
    %v402 = vunpack.c.l.b16 %v331
    %v403 = vunpack.c.h.b16 %v331
    %v404 = vunpack.c.l.b16 %v332
    %v405 = vunpack.c.h.b16 %v332
    %v406 = vunpack.c.l.b16 %v333
    %v407 = vunpack.c.h.b16 %v333
    %v408 = vunpack.c.l.b16 %v334
    %v409 = vunpack.c.h.b16 %v334
    %v410 = vunpack.c.l.b16 %v335
    %v411 = vunpack.c.h.b16 %v335
    %v412 = vunpack.c.l.b16 %v336
    %v413 = vunpack.c.h.b16 %v336
    %v414 = vunpack.c.l.b16 %v337
    %v415 = vunpack.c.h.b16 %v337
    %v416 = vunpack.c.l.b16 %v338
    %v417 = vunpack.c.h.b16 %v338
    %v418 = vunpack.c.l.b16 %v339
    %v419 = vunpack.c.h.b16 %v339
    %v420 = vunpack.c.l.b16 %v340
    %v421 = vunpack.c.h.b16 %v340
    %v422 = vunpack.c.l.b16 %v341
    %v423 = vunpack.c.h.b16 %v341
    %v424 = vunpack.c.l.b16 %v342
    %v425 = vunpack.c.h.b16 %v342
    %v426 = vunpack.c.l.b16 %v343
    %v427 = vunpack.c.h.b16 %v343
    %v428 = vunpack.c.l.b16 %v344
    %v429 = vunpack.c.h.b16 %v344
    %v430 = vunpack.c.l.b16 %v345
    %v431 = vunpack.c.h.b16 %v345
    %v432 = vunpack.c.l.b16 %v346
    %v433 = vunpack.c.h.b16 %v346
    %v434 = vunpack.c.l.b16 %v347
    %v435 = vunpack.c.h.b16 %v347
    %v436 = vunpack.c.l.b16 %v348
    %v437 = vunpack.c.h.b16 %v348
    %v438 = vunpack.c.l.b16 %v349
    %v439 = vunpack.c.h.b16 %v349
    %v440 = vunpack.c.l.b16 %v350
    %v441 = vunpack.c.h.b16 %v350
    %v442 = vunpack.c.l.b16 %v351
    %v443 = vunpack.c.h.b16 %v351
    %v444 = vunpack.c.l.b16 %v352
    %v445 = vunpack.c.h.b16 %v352
    %v446 = vunpack.c.l.b16 %v353
    %v447 = vunpack.c.h.b16 %v353
    %v448 = vunpack.c.l.b16 %v354
    %v449 = vunpack.c.h.b16 %v354
    %v450 = vunpack.c.l.b16 %v355
    %v451 = vunpack.c.h.b16 %v355
    %v452 = vpack.c.b16 %v392, %v388
    %v453 = vpack.c.b16 %v393, %v389
    %v454 = vpack.c.b16 %v394, %v390
    %v455 = vpack.c.b16 %v395, %v391
    %v456 = vpack.c.b16 %v400, %v396
    %v457 = vpack.c.b16 %v401, %v397
    %v458 = vpack.c.b16 %v402, %v398
    %v459 = vpack.c.b16 %v403, %v399
    %v460 = vpack.c.b16 %v408, %v404
    %v461 = vpack.c.b16 %v409, %v405
    %v462 = vpack.c.b16 %v410, %v406
    %v463 = vpack.c.b16 %v411, %v407
    %v464 = vpack.c.b16 %v416, %v412
    %v465 = vpack.c.b16 %v417, %v413
    %v466 = vpack.c.b16 %v418, %v414
    %v467 = vpack.c.b16 %v419, %v415
    %v468 = vpack.c.b16 %v424, %v420
    %v469 = vpack.c.b16 %v425, %v421
    %v470 = vpack.c.b16 %v426, %v422
    %v471 = vpack.c.b16 %v427, %v423
    %v472 = vpack.c.b16 %v432, %v428
    %v473 = vpack.c.b16 %v433, %v429
    %v474 = vpack.c.b16 %v434, %v430
    %v475 = vpack.c.b16 %v435, %v431
    %v476 = vpack.c.b16 %v440, %v436
    %v477 = vpack.c.b16 %v441, %v437
    %v478 = vpack.c.b16 %v442, %v438
    %v479 = vpack.c.b16 %v443, %v439
    %v480 = vpack.c.b16 %v448, %v444
    %v481 = vpack.c.b16 %v449, %v445
    %v482 = vpack.c.b16 %v450, %v446
    %v483 = vpack.c.b16 %v451, %v447
    %516 = vmatprep.subr.bf16.mxu0 %v453
    %517 = vmatpush1.bf16.msra.mxu0 %v452
    %518 = vmatprep.subr.bf16.mxu0 %v457
    %519 = vmatpush1.bf16.msra.mxu0 %v456
    %520 = vmatprep.subr.bf16.mxu0 %v461
    %521 = vmatpush1.bf16.msra.mxu0 %v460
    %522 = vmatprep.subr.bf16.mxu0 %v465
    %523 = vmatpush1.bf16.msra.mxu0 %v464
    %524 = vmatprep.subr.bf16.mxu0 %v469
    %525 = vmatpush1.bf16.msra.mxu0 %v468
    %526 = vmatprep.subr.bf16.mxu0 %v473
    %527 = vmatpush1.bf16.msra.mxu0 %v472
    %528 = vmatprep.subr.bf16.mxu0 %v477
    %529 = vmatpush1.bf16.msra.mxu0 %v476
    %530 = vmatprep.subr.bf16.mxu0 %v481
    %531 = vmatpush1.bf16.msra.mxu0 %v480
    %532 = vmatprep.subr.bf16.mxu0 0
    %533 = vmatpush1.bf16.msra.mxu0 0
    %534 = vmatprep.subr.bf16.mxu0 0
    %535 = vmatpush1.bf16.msra.mxu0 0
    %536 = vmatprep.subr.bf16.mxu0 0
    %537 = vmatpush1.bf16.msra.mxu0 0
    %538 = vmatprep.subr.bf16.mxu0 0
    %539 = vmatpush1.bf16.msra.mxu0 0
    %540 = vmatprep.subr.bf16.mxu0 0
    %541 = vmatpush1.bf16.msra.mxu0 0
    %542 = vmatprep.subr.bf16.mxu0 0
    %543 = vmatpush1.bf16.msra.mxu0 0
    %544 = vmatprep.subr.bf16.mxu0 0
    %545 = vmatpush1.bf16.msra.mxu0 0
    %546 = vmatprep.subr.bf16.mxu0 0
    %547 = vmatpush1.bf16.msra.mxu0 0
    %548 = vmatprep.mubr.bf16.mxu0 0
    %549 = vmatmul.mubr.bf16.gmra.mrb[0].mxu0 0
    %v550 = vpop.f32.mrb[0].mxu0
    %v551 = vadd.f32 0.0, %v550
    %v552 = vpop.f32.mrb[0].mxu0
    %v553 = vadd.f32 0.0, %v552
    %v554 = vpop.f32.mrb[0].mxu0
    %v555 = vpop.f32.mrb[0].mxu0
    %556 = vdwg.mxu0
    %557 = vmatprep.subr.bf16.mxu0 %v455
    %558 = vmatpush1.bf16.msra.mxu0 %v454
    %559 = vmatprep.subr.bf16.mxu0 %v459
    %560 = vmatpush1.bf16.msra.mxu0 %v458
    %561 = vmatprep.subr.bf16.mxu0 %v463
    %562 = vmatpush1.bf16.msra.mxu0 %v462
    %563 = vmatprep.subr.bf16.mxu0 %v467
    %564 = vmatpush1.bf16.msra.mxu0 %v466
    %565 = vmatprep.subr.bf16.mxu0 %v471
    %566 = vmatpush1.bf16.msra.mxu0 %v470
    %567 = vmatprep.subr.bf16.mxu0 %v475
    %568 = vmatpush1.bf16.msra.mxu0 %v474
    %569 = vmatprep.subr.bf16.mxu0 %v479
    %570 = vmatpush1.bf16.msra.mxu0 %v478
    %571 = vmatprep.subr.bf16.mxu0 %v483
    %572 = vmatpush1.bf16.msra.mxu0 %v482
    %573 = vmatprep.subr.bf16.mxu0 0
    %574 = vmatpush1.bf16.msra.mxu0 0
    %575 = vmatprep.subr.bf16.mxu0 0
    %576 = vmatpush1.bf16.msra.mxu0 0
    %577 = vmatprep.subr.bf16.mxu0 0
    %578 = vmatpush1.bf16.msra.mxu0 0
    %579 = vmatprep.subr.bf16.mxu0 0
    %580 = vmatpush1.bf16.msra.mxu0 0
    %581 = vmatprep.subr.bf16.mxu0 0
    %582 = vmatpush1.bf16.msra.mxu0 0
    %583 = vmatprep.subr.bf16.mxu0 0
    %584 = vmatpush1.bf16.msra.mxu0 0
    %585 = vmatprep.subr.bf16.mxu0 0
    %586 = vmatpush1.bf16.msra.mxu0 0
    %587 = vmatprep.subr.bf16.mxu0 0
    %588 = vmatpush1.bf16.msra.mxu0 0
    %589 = vmatprep.mubr.bf16.mxu0 0
    %590 = vmatmul.mubr.bf16.gmra.mrb[0].mxu0 0
    %v591 = vpop.f32.mrb[0].mxu0
    %v592 = vadd.f32 0.0, %v591
    %v593 = vpop.f32.mrb[0].mxu0
    %v594 = vadd.f32 0.0, %v593
    %v595 = vpop.f32.mrb[0].mxu0
    %v596 = vpop.f32.mrb[0].mxu0
    %597 = vdwg.mxu0
    %v598 = vadd.f32 %v320, %v551
    %v599 = vadd.f32 %v321, %v553
    %v600 = vadd.f32 %v322, %v592
    %v601 = vadd.f32 %v323, %v594
    %v602 = vtanh.pop %v598
    %v603 = vtanh.pop %v599
    %v604 = vtanh.pop %v600
    %v605 = vtanh.pop %v601
    %v606 = vmul.f32 %v602, 0.5
    %v607 = vmul.f32 %v603, 0.5
    %v608 = vmul.f32 %v604, 0.5
    %v609 = vadd.f32 %v606, 0.5
    %v610 = vadd.f32 %v607, 0.5
    %v611 = vadd.f32 %v608, 0.5
    %v612 = vmul.f32 %v610, 0.0
    %v613 = vmul.f32 %v609, %v605
    %v614 = vadd.f32 %v612, %v613
    %v615 = vtanh.pop %v614
    %v616 = vmul.f32 %v611, %v615
    %s617 = smul.u32 1, 4
    %s618 = smul.addr %s617, 8
    %s619 = scalar_lea.vmem [#allocation2], %s618
    %v620 = vld [vmem:[%s619] sm:$0xff]
    %v621 = vld [vmem:[%s619 + $0x8] sm:$0xff]
    %v622 = vld [vmem:[%s619 + $0x10] sm:$0xff]
    %v623 = vld [vmem:[%s619 + $0x18] sm:$0xff]
    %v624 = vpack.c.bf16 %v616, %v616
    %625 = vmatprep.subr.bf16.mxu0 %v453
    %626 = vmatpush1.bf16.msra.mxu0 %v452
    %627 = vmatprep.subr.bf16.mxu0 %v457
    %628 = vmatpush1.bf16.msra.mxu0 %v456
    %629 = vmatprep.subr.bf16.mxu0 %v461
    %630 = vmatpush1.bf16.msra.mxu0 %v460
    %631 = vmatprep.subr.bf16.mxu0 %v465
    %632 = vmatpush1.bf16.msra.mxu0 %v464
    %633 = vmatprep.subr.bf16.mxu0 %v469
    %634 = vmatpush1.bf16.msra.mxu0 %v468
    %635 = vmatprep.subr.bf16.mxu0 %v473
    %636 = vmatpush1.bf16.msra.mxu0 %v472
    %637 = vmatprep.subr.bf16.mxu0 %v477
    %638 = vmatpush1.bf16.msra.mxu0 %v476
    %639 = vmatprep.subr.bf16.mxu0 %v481
    %640 = vmatpush1.bf16.msra.mxu0 %v480
    %641 = vmatprep.subr.bf16.mxu0 0
    %642 = vmatpush1.bf16.msra.mxu0 0
    %643 = vmatprep.subr.bf16.mxu0 0
    %644 = vmatpush1.bf16.msra.mxu0 0
    %645 = vmatprep.subr.bf16.mxu0 0
    %646 = vmatpush1.bf16.msra.mxu0 0
    %647 = vmatprep.subr.bf16.mxu0 0
    %648 = vmatpush1.bf16.msra.mxu0 0
    %649 = vmatprep.subr.bf16.mxu0 0
    %650 = vmatpush1.bf16.msra.mxu0 0
    %651 = vmatprep.subr.bf16.mxu0 0
    %652 = vmatpush1.bf16.msra.mxu0 0
    %653 = vmatprep.subr.bf16.mxu0 0
    %654 = vmatpush1.bf16.msra.mxu0 0
    %655 = vmatprep.subr.bf16.mxu0 0
    %656 = vmatpush1.bf16.msra.mxu0 0
    %657 = vmatprep.mubr.bf16.mxu0 0
    %658 = vmatmul.mubr.bf16.gmra.mrb[0].mxu0 %v624
    %v659 = vpop.f32.mrb[0].mxu0
    %v660 = vadd.f32 0.0, %v659
    %v661 = vpop.f32.mrb[0].mxu0
    %v662 = vadd.f32 0.0, %v661
    %v663 = vpop.f32.mrb[0].mxu0
    %v664 = vpop.f32.mrb[0].mxu0
    %665 = vdwg.mxu0
    %666 = vmatprep.subr.bf16.mxu0 %v455
    %667 = vmatpush1.bf16.msra.mxu0 %v454
    %668 = vmatprep.subr.bf16.mxu0 %v459
    %669 = vmatpush1.bf16.msra.mxu0 %v458
    %670 = vmatprep.subr.bf16.mxu0 %v463
    %671 = vmatpush1.bf16.msra.mxu0 %v462
    %672 = vmatprep.subr.bf16.mxu0 %v467
    %673 = vmatpush1.bf16.msra.mxu0 %v466
    %674 = vmatprep.subr.bf16.mxu0 %v471
    %675 = vmatpush1.bf16.msra.mxu0 %v470
    %676 = vmatprep.subr.bf16.mxu0 %v475
    %677 = vmatpush1.bf16.msra.mxu0 %v474
    %678 = vmatprep.subr.bf16.mxu0 %v479
    %679 = vmatpush1.bf16.msra.mxu0 %v478
    %680 = vmatprep.subr.bf16.mxu0 %v483
    %681 = vmatpush1.bf16.msra.mxu0 %v482
    %682 = vmatprep.subr.bf16.mxu0 0
    %683 = vmatpush1.bf16.msra.mxu0 0
    %684 = vmatprep.subr.bf16.mxu0 0
    %685 = vmatpush1.bf16.msra.mxu0 0
    %686 = vmatprep.subr.bf16.mxu0 0
    %687 = vmatpush1.bf16.msra.mxu0 0
    %688 = vmatprep.subr.bf16.mxu0 0
    %689 = vmatpush1.bf16.msra.mxu0 0
    %690 = vmatprep.subr.bf16.mxu0 0
    %691 = vmatpush1.bf16.msra.mxu0 0
    %692 = vmatprep.subr.bf16.mxu0 0
    %693 = vmatpush1.bf16.msra.mxu0 0
    %694 = vmatprep.subr.bf16.mxu0 0
    %695 = vmatpush1.bf16.msra.mxu0 0
    %696 = vmatprep.subr.bf16.mxu0 0
    %697 = vmatpush1.bf16.msra.mxu0 0
    %698 = vmatprep.mubr.bf16.mxu0 0
    %699 = vmatmul.mubr.bf16.gmra.mrb[0].mxu0 %v624
    %v700 = vpop.f32.mrb[0].mxu0
    %v701 = vadd.f32 0.0, %v700
    %v702 = vpop.f32.mrb[0].mxu0
    %v703 = vadd.f32 0.0, %v702
    %v704 = vpop.f32.mrb[0].mxu0
    %v705 = vpop.f32.mrb[0].mxu0
    %706 = vdwg.mxu0
    %v707 = vadd.f32 %v620, %v660
    %v708 = vadd.f32 %v621, %v662
    %v709 = vadd.f32 %v622, %v701
    %v710 = vadd.f32 %v623, %v703
    %v711 = vtanh.pop %v707
    %v712 = vtanh.pop %v708
    %v713 = vtanh.pop %v709
    %v714 = vtanh.pop %v710
    %v715 = vmul.f32 %v711, 0.5
    %v716 = vmul.f32 %v712, 0.5
    %v717 = vmul.f32 %v713, 0.5
    %v718 = vadd.f32 %v715, 0.5
    %v719 = vadd.f32 %v716, 0.5
    %v720 = vadd.f32 %v717, 0.5
    %v721 = vmul.f32 %v719, %v614
    %v722 = vmul.f32 %v718, %v714
    %v723 = vadd.f32 %v721, %v722
    %v724 = vtanh.pop %v723
    %v725 = vmul.f32 %v720, %v724
    %s726 = smul.u32 2, 4
    %s727 = smul.addr %s726, 8
    %s728 = scalar_lea.vmem [#allocation2], %s727
    %v729 = vld [vmem:[%s728] sm:$0xff]
    %v730 = vld [vmem:[%s728 + $0x8] sm:$0xff]
    %v731 = vld [vmem:[%s728 + $0x10] sm:$0xff]
    %v732 = vld [vmem:[%s728 + $0x18] sm:$0xff]
    %v733 = vpack.c.bf16 %v725, %v725
    %734 = vmatprep.subr.bf16.mxu0 %v453
    %735 = vmatpush1.bf16.msra.mxu0 %v452
    %736 = vmatprep.subr.bf16.mxu0 %v457
    %737 = vmatpush1.bf16.msra.mxu0 %v456
    %738 = vmatprep.subr.bf16.mxu0 %v461
    %739 = vmatpush1.bf16.msra.mxu0 %v460
    %740 = vmatprep.subr.bf16.mxu0 %v465
    %741 = vmatpush1.bf16.msra.mxu0 %v464
    %742 = vmatprep.subr.bf16.mxu0 %v469
    %743 = vmatpush1.bf16.msra.mxu0 %v468
    %744 = vmatprep.subr.bf16.mxu0 %v473
    %745 = vmatpush1.bf16.msra.mxu0 %v472
    %746 = vmatprep.subr.bf16.mxu0 %v477
    %747 = vmatpush1.bf16.msra.mxu0 %v476
    %748 = vmatprep.subr.bf16.mxu0 %v481
    %749 = vmatpush1.bf16.msra.mxu0 %v480
    %750 = vmatprep.subr.bf16.mxu0 0
    %751 = vmatpush1.bf16.msra.mxu0 0
    %752 = vmatprep.subr.bf16.mxu0 0
    %753 = vmatpush1.bf16.msra.mxu0 0
    %754 = vmatprep.subr.bf16.mxu0 0
    %755 = vmatpush1.bf16.msra.mxu0 0
    %756 = vmatprep.subr.bf16.mxu0 0
    %757 = vmatpush1.bf16.msra.mxu0 0
    %758 = vmatprep.subr.bf16.mxu0 0
    %759 = vmatpush1.bf16.msra.mxu0 0
    %760 = vmatprep.subr.bf16.mxu0 0
    %761 = vmatpush1.bf16.msra.mxu0 0
    %762 = vmatprep.subr.bf16.mxu0 0
    %763 = vmatpush1.bf16.msra.mxu0 0
    %764 = vmatprep.subr.bf16.mxu0 0
    %765 = vmatpush1.bf16.msra.mxu0 0
    %766 = vmatprep.mubr.bf16.mxu0 0
    %767 = vmatmul.mubr.bf16.gmra.mrb[0].mxu0 %v733
    %v768 = vpop.f32.mrb[0].mxu0
    %v769 = vadd.f32 0.0, %v768
    %v770 = vpop.f32.mrb[0].mxu0
    %v771 = vadd.f32 0.0, %v770
    %v772 = vpop.f32.mrb[0].mxu0
    %v773 = vpop.f32.mrb[0].mxu0
    %774 = vdwg.mxu0
    %775 = vmatprep.subr.bf16.mxu0 %v455
    %776 = vmatpush1.bf16.msra.mxu0 %v454
    %777 = vmatprep.subr.bf16.mxu0 %v459
    %778 = vmatpush1.bf16.msra.mxu0 %v458
    %779 = vmatprep.subr.bf16.mxu0 %v463
    %780 = vmatpush1.bf16.msra.mxu0 %v462
    %781 = vmatprep.subr.bf16.mxu0 %v467
    %782 = vmatpush1.bf16.msra.mxu0 %v466
    %783 = vmatprep.subr.bf16.mxu0 %v471
    %784 = vmatpush1.bf16.msra.mxu0 %v470
    %785 = vmatprep.subr.bf16.mxu0 %v475
    %786 = vmatpush1.bf16.msra.mxu0 %v474
    %787 = vmatprep.subr.bf16.mxu0 %v479
    %788 = vmatpush1.bf16.msra.mxu0 %v478
    %789 = vmatprep.subr.bf16.mxu0 %v483
    %790 = vmatpush1.bf16.msra.mxu0 %v482
    %791 = vmatprep.subr.bf16.mxu0 0
    %792 = vmatpush1.bf16.msra.mxu0 0
    %793 = vmatprep.subr.bf16.mxu0 0
    %794 = vmatpush1.bf16.msra.mxu0 0
    %795 = vmatprep.subr.bf16.mxu0 0
    %796 = vmatpush1.bf16.msra.mxu0 0
    %797 = vmatprep.subr.bf16.mxu0 0
    %798 = vmatpush1.bf16.msra.mxu0 0
    %799 = vmatprep.subr.bf16.mxu0 0
    %800 = vmatpush1.bf16.msra.mxu0 0
    %801 = vmatprep.subr.bf16.mxu0 0
    %802 = vmatpush1.bf16.msra.mxu0 0
    %803 = vmatprep.subr.bf16.mxu0 0
    %804 = vmatpush1.bf16.msra.mxu0 0
    %805 = vmatprep.subr.bf16.mxu0 0
    %806 = vmatpush1.bf16.msra.mxu0 0
    %807 = vmatprep.mubr.bf16.mxu0 0
    %808 = vmatmul.mubr.bf16.gmra.mrb[0].mxu0 %v733
    %v809 = vpop.f32.mrb[0].mxu0
    %v810 = vadd.f32 0.0, %v809
    %v811 = vpop.f32.mrb[0].mxu0
    %v812 = vadd.f32 0.0, %v811
    %v813 = vpop.f32.mrb[0].mxu0
    %v814 = vpop.f32.mrb[0].mxu0
    %815 = vdwg.mxu0
    %v816 = vadd.f32 %v729, %v769
    %v817 = vadd.f32 %v730, %v771
    %v818 = vadd.f32 %v731, %v810
    %v819 = vadd.f32 %v732, %v812
    %v820 = vtanh.pop %v816
    %v821 = vtanh.pop %v817
    %v822 = vtanh.pop %v818
    %v823 = vtanh.pop %v819
    %v824 = vmul.f32 %v820, 0.5
    %v825 = vmul.f32 %v821, 0.5
    %v826 = vmul.f32 %v822, 0.5
    %v827 = vadd.f32 %v824, 0.5
    %v828 = vadd.f32 %v825, 0.5
    %v829 = vadd.f32 %v826, 0.5
    %v830 = vmul.f32 %v828, %v723
    %v831 = vmul.f32 %v827, %v823
    %v832 = vadd.f32 %v830, %v831
    %v833 = vtanh.pop %v832
    %v834 = vmul.f32 %v829, %v833
    %s835 = smul.u32 3, 4
    %s836 = smul.addr %s835, 8
    %s837 = scalar_lea.vmem [#allocation2], %s836
    %v838 = vld [vmem:[%s837] sm:$0xff]
    %v839 = vld [vmem:[%s837 + $0x8] sm:$0xff]
    %v840 = vld [vmem:[%s837 + $0x10] sm:$0xff]
    %v841 = vld [vmem:[%s837 + $0x18] sm:$0xff]
    %v842 = vpack.c.bf16 %v834, %v834
    %843 = vmatprep.subr.bf16.mxu0 %v453
    %844 = vmatpush1.bf16.msra.mxu0 %v452
    %845 = vmatprep.subr.bf16.mxu0 %v457
    %846 = vmatpush1.bf16.msra.mxu0 %v456
    %847 = vmatprep.subr.bf16.mxu0 %v461
    %848 = vmatpush1.bf16.msra.mxu0 %v460
    %849 = vmatprep.subr.bf16.mxu0 %v465
    %850 = vmatpush1.bf16.msra.mxu0 %v464
    %851 = vmatprep.subr.bf16.mxu0 %v469
    %852 = vmatpush1.bf16.msra.mxu0 %v468
    %853 = vmatprep.subr.bf16.mxu0 %v473
    %854 = vmatpush1.bf16.msra.mxu0 %v472
    %855 = vmatprep.subr.bf16.mxu0 %v477
    %856 = vmatpush1.bf16.msra.mxu0 %v476
    %857 = vmatprep.subr.bf16.mxu0 %v481
    %858 = vmatpush1.bf16.msra.mxu0 %v480
    %859 = vmatprep.subr.bf16.mxu0 0
    %860 = vmatpush1.bf16.msra.mxu0 0
    %861 = vmatprep.subr.bf16.mxu0 0
    %862 = vmatpush1.bf16.msra.mxu0 0
    %863 = vmatprep.subr.bf16.mxu0 0
    %864 = vmatpush1.bf16.msra.mxu0 0
    %865 = vmatprep.subr.bf16.mxu0 0
    %866 = vmatpush1.bf16.msra.mxu0 0
    %867 = vmatprep.subr.bf16.mxu0 0
    %868 = vmatpush1.bf16.msra.mxu0 0
    %869 = vmatprep.subr.bf16.mxu0 0
    %870 = vmatpush1.bf16.msra.mxu0 0
    %871 = vmatprep.subr.bf16.mxu0 0
    %872 = vmatpush1.bf16.msra.mxu0 0
    %873 = vmatprep.subr.bf16.mxu0 0
    %874 = vmatpush1.bf16.msra.mxu0 0
    %875 = vmatprep.mubr.bf16.mxu0 0
    %876 = vmatmul.mubr.bf16.gmra.mrb[0].mxu0 %v842
    %v877 = vpop.f32.mrb[0].mxu0
    %v878 = vadd.f32 0.0, %v877
    %v879 = vpop.f32.mrb[0].mxu0
    %v880 = vadd.f32 0.0, %v879
    %v881 = vpop.f32.mrb[0].mxu0
    %v882 = vpop.f32.mrb[0].mxu0
    %883 = vdwg.mxu0
    %884 = vmatprep.subr.bf16.mxu0 %v455
    %885 = vmatpush1.bf16.msra.mxu0 %v454
    %886 = vmatprep.subr.bf16.mxu0 %v459
    %887 = vmatpush1.bf16.msra.mxu0 %v458
    %888 = vmatprep.subr.bf16.mxu0 %v463
    %889 = vmatpush1.bf16.msra.mxu0 %v462
    %890 = vmatprep.subr.bf16.mxu0 %v467
    %891 = vmatpush1.bf16.msra.mxu0 %v466
    %892 = vmatprep.subr.bf16.mxu0 %v471
    %893 = vmatpush1.bf16.msra.mxu0 %v470
    %894 = vmatprep.subr.bf16.mxu0 %v475
    %895 = vmatpush1.bf16.msra.mxu0 %v474
    %896 = vmatprep.subr.bf16.mxu0 %v479
    %897 = vmatpush1.bf16.msra.mxu0 %v478
    %898 = vmatprep.subr.bf16.mxu0 %v483
    %899 = vmatpush1.bf16.msra.mxu0 %v482
    %900 = vmatprep.subr.bf16.mxu0 0
    %901 = vmatpush1.bf16.msra.mxu0 0
    %902 = vmatprep.subr.bf16.mxu0 0
    %903 = vmatpush1.bf16.msra.mxu0 0
    %904 = vmatprep.subr.bf16.mxu0 0
    %905 = vmatpush1.bf16.msra.mxu0 0
    %906 = vmatprep.subr.bf16.mxu0 0
    %907 = vmatpush1.bf16.msra.mxu0 0
    %908 = vmatprep.subr.bf16.mxu0 0
    %909 = vmatpush1.bf16.msra.mxu0 0
    %910 = vmatprep.subr.bf16.mxu0 0
    %911 = vmatpush1.bf16.msra.mxu0 0
    %912 = vmatprep.subr.bf16.mxu0 0
    %913 = vmatpush1.bf16.msra.mxu0 0
    %914 = vmatprep.subr.bf16.mxu0 0
    %915 = vmatpush1.bf16.msra.mxu0 0
    %916 = vmatprep.mubr.bf16.mxu0 0
    %917 = vmatmul.mubr.bf16.gmra.mrb[0].mxu0 %v842
    %v918 = vpop.f32.mrb[0].mxu0
    %v919 = vadd.f32 0.0, %v918
    %v920 = vpop.f32.mrb[0].mxu0
    %v921 = vadd.f32 0.0, %v920
    %v922 = vpop.f32.mrb[0].mxu0
    %v923 = vpop.f32.mrb[0].mxu0
    %924 = vdwg.mxu0
    %v925 = vadd.f32 %v838, %v878
    %v926 = vadd.f32 %v839, %v880
    %v927 = vadd.f32 %v840, %v919
    %v928 = vadd.f32 %v841, %v921
    %v929 = vtanh.pop %v925
    %v930 = vtanh.pop %v926
    %v931 = vtanh.pop %v927
    %v932 = vtanh.pop %v928
    %v933 = vmul.f32 %v929, 0.5
    %v934 = vmul.f32 %v930, 0.5
    %v935 = vmul.f32 %v931, 0.5
    %v936 = vadd.f32 %v933, 0.5
    %v937 = vadd.f32 %v934, 0.5
    %v938 = vadd.f32 %v935, 0.5
    %v939 = vmul.f32 %v937, %v832
    %v940 = vmul.f32 %v936, %v932
    %v941 = vadd.f32 %v939, %v940
    %v942 = vtanh.pop %v941
    %v943 = vmul.f32 %v938, %v942
    %s944 = smul.u32 4, 4
    %s945 = smul.addr %s944, 8
    %s946 = scalar_lea.vmem [#allocation2], %s945
    %v947 = vld [vmem:[%s946] sm:$0xff]
    %v948 = vld [vmem:[%s946 + $0x8] sm:$0xff]
    %v949 = vld [vmem:[%s946 + $0x10] sm:$0xff]
    %v950 = vld [vmem:[%s946 + $0x18] sm:$0xff]
    %v951 = vpack.c.bf16 %v943, %v943
    %952 = vmatprep.subr.bf16.mxu0 %v453
    %953 = vmatpush1.bf16.msra.mxu0 %v452
    %954 = vmatprep.subr.bf16.mxu0 %v457
    %955 = vmatpush1.bf16.msra.mxu0 %v456
    %956 = vmatprep.subr.bf16.mxu0 %v461
    %957 = vmatpush1.bf16.msra.mxu0 %v460
    %958 = vmatprep.subr.bf16.mxu0 %v465
    %959 = vmatpush1.bf16.msra.mxu0 %v464
    %960 = vmatprep.subr.bf16.mxu0 %v469
    %961 = vmatpush1.bf16.msra.mxu0 %v468
    %962 = vmatprep.subr.bf16.mxu0 %v473
    %963 = vmatpush1.bf16.msra.mxu0 %v472
    %964 = vmatprep.subr.bf16.mxu0 %v477
    %965 = vmatpush1.bf16.msra.mxu0 %v476
    %966 = vmatprep.subr.bf16.mxu0 %v481
    %967 = vmatpush1.bf16.msra.mxu0 %v480
    %968 = vmatprep.subr.bf16.mxu0 0
    %969 = vmatpush1.bf16.msra.mxu0 0
    %970 = vmatprep.subr.bf16.mxu0 0
    %971 = vmatpush1.bf16.msra.mxu0 0
    %972 = vmatprep.subr.bf16.mxu0 0
    %973 = vmatpush1.bf16.msra.mxu0 0
    %974 = vmatprep.subr.bf16.mxu0 0
    %975 = vmatpush1.bf16.msra.mxu0 0
    %976 = vmatprep.subr.bf16.mxu0 0
    %977 = vmatpush1.bf16.msra.mxu0 0
    %978 = vmatprep.subr.bf16.mxu0 0
    %979 = vmatpush1.bf16.msra.mxu0 0
    %980 = vmatprep.subr.bf16.mxu0 0
    %981 = vmatpush1.bf16.msra.mxu0 0
    %982 = vmatprep.subr.bf16.mxu0 0
    %983 = vmatpush1.bf16.msra.mxu0 0
    %984 = vmatprep.mubr.bf16.mxu0 0
    %985 = vmatmul.mubr.bf16.gmra.mrb[0].mxu0 %v951
    %v986 = vpop.f32.mrb[0].mxu0
    %v987 = vadd.f32 0.0, %v986
    %v988 = vpop.f32.mrb[0].mxu0
    %v989 = vadd.f32 0.0, %v988
    %v990 = vpop.f32.mrb[0].mxu0
    %v991 = vpop.f32.mrb[0].mxu0
    %992 = vdwg.mxu0
    %993 = vmatprep.subr.bf16.mxu0 %v455
    %994 = vmatpush1.bf16.msra.mxu0 %v454
    %995 = vmatprep.subr.bf16.mxu0 %v459
    %996 = vmatpush1.bf16.msra.mxu0 %v458
    %997 = vmatprep.subr.bf16.mxu0 %v463
    %998 = vmatpush1.bf16.msra.mxu0 %v462
    %999 = vmatprep.subr.bf16.mxu0 %v467
    %1000 = vmatpush1.bf16.msra.mxu0 %v466
    %1001 = vmatprep.subr.bf16.mxu0 %v471
    %1002 = vmatpush1.bf16.msra.mxu0 %v470
    %1003 = vmatprep.subr.bf16.mxu0 %v475
    %1004 = vmatpush1.bf16.msra.mxu0 %v474
    %1005 = vmatprep.subr.bf16.mxu0 %v479
    %1006 = vmatpush1.bf16.msra.mxu0 %v478
    %1007 = vmatprep.subr.bf16.mxu0 %v483
    %1008 = vmatpush1.bf16.msra.mxu0 %v482
    %1009 = vmatprep.subr.bf16.mxu0 0
    %1010 = vmatpush1.bf16.msra.mxu0 0
    %1011 = vmatprep.subr.bf16.mxu0 0
    %1012 = vmatpush1.bf16.msra.mxu0 0
    %1013 = vmatprep.subr.bf16.mxu0 0
    %1014 = vmatpush1.bf16.msra.mxu0 0
    %1015 = vmatprep.subr.bf16.mxu0 0
    %1016 = vmatpush1.bf16.msra.mxu0 0
    %1017 = vmatprep.subr.bf16.mxu0 0
    %1018 = vmatpush1.bf16.msra.mxu0 0
    %1019 = vmatprep.subr.bf16.mxu0 0
    %1020 = vmatpush1.bf16.msra.mxu0 0
    %1021 = vmatprep.subr.bf16.mxu0 0
    %1022 = vmatpush1.bf16.msra.mxu0 0
    %1023 = vmatprep.subr.bf16.mxu0 0
    %1024 = vmatpush1.bf16.msra.mxu0 0
    %1025 = vmatprep.mubr.bf16.mxu0 0
    %1026 = vmatmul.mubr.bf16.gmra.mrb[0].mxu0 %v951
    %v1027 = vpop.f32.mrb[0].mxu0
    %v1028 = vadd.f32 0.0, %v1027
    %v1029 = vpop.f32.mrb[0].mxu0
    %v1030 = vadd.f32 0.0, %v1029
    %v1031 = vpop.f32.mrb[0].mxu0
    %v1032 = vpop.f32.mrb[0].mxu0
    %1033 = vdwg.mxu0
    %v1034 = vadd.f32 %v947, %v987
    %v1035 = vadd.f32 %v948, %v989
    %v1036 = vadd.f32 %v949, %v1028
    %v1037 = vadd.f32 %v950, %v1030
    %v1038 = vtanh.pop %v1034
    %v1039 = vtanh.pop %v1035
    %v1040 = vtanh.pop %v1036
    %v1041 = vtanh.pop %v1037
    %v1042 = vmul.f32 %v1038, 0.5
    %v1043 = vmul.f32 %v1039, 0.5
    %v1044 = vmul.f32 %v1040, 0.5
    %v1045 = vadd.f32 %v1042, 0.5
    %v1046 = vadd.f32 %v1043, 0.5
    %v1047 = vadd.f32 %v1044, 0.5
    %v1048 = vmul.f32 %v1046, %v941
    %v1049 = vmul.f32 %v1045, %v1041
    %v1050 = vadd.f32 %v1048, %v1049
    %v1051 = vtanh.pop %v1050
    %v1052 = vmul.f32 %v1047, %v1051
    %s1053 = smul.u32 5, 4
    %s1054 = smul.addr %s1053, 8
    %s1055 = scalar_lea.vmem [#allocation2], %s1054
    %v1056 = vld [vmem:[%s1055] sm:$0xff]
    %v1057 = vld [vmem:[%s1055 + $0x8] sm:$0xff]
    %v1058 = vld [vmem:[%s1055 + $0x10] sm:$0xff]
    %v1059 = vld [vmem:[%s1055 + $0x18] sm:$0xff]
    %v1060 = vpack.c.bf16 %v1052, %v1052
    %1061 = vmatprep.subr.bf16.mxu0 %v453
    %1062 = vmatpush1.bf16.msra.mxu0 %v452
    %1063 = vmatprep.subr.bf16.mxu0 %v457
    %1064 = vmatpush1.bf16.msra.mxu0 %v456
    %1065 = vmatprep.subr.bf16.mxu0 %v461
    %1066 = vmatpush1.bf16.msra.mxu0 %v460
    %1067 = vmatprep.subr.bf16.mxu0 %v465
    %1068 = vmatpush1.bf16.msra.mxu0 %v464
    %1069 = vmatprep.subr.bf16.mxu0 %v469
    %1070 = vmatpush1.bf16.msra.mxu0 %v468
    %1071 = vmatprep.subr.bf16.mxu0 %v473
    %1072 = vmatpush1.bf16.msra.mxu0 %v472
    %1073 = vmatprep.subr.bf16.mxu0 %v477
    %1074 = vmatpush1.bf16.msra.mxu0 %v476
    %1075 = vmatprep.subr.bf16.mxu0 %v481
    %1076 = vmatpush1.bf16.msra.mxu0 %v480
    %1077 = vmatprep.subr.bf16.mxu0 0
    %1078 = vmatpush1.bf16.msra.mxu0 0
    %1079 = vmatprep.subr.bf16.mxu0 0
    %1080 = vmatpush1.bf16.msra.mxu0 0
    %1081 = vmatprep.subr.bf16.mxu0 0
    %1082 = vmatpush1.bf16.msra.mxu0 0
    %1083 = vmatprep.subr.bf16.mxu0 0
    %1084 = vmatpush1.bf16.msra.mxu0 0
    %1085 = vmatprep.subr.bf16.mxu0 0
    %1086 = vmatpush1.bf16.msra.mxu0 0
    %1087 = vmatprep.subr.bf16.mxu0 0
    %1088 = vmatpush1.bf16.msra.mxu0 0
    %1089 = vmatprep.subr.bf16.mxu0 0
    %1090 = vmatpush1.bf16.msra.mxu0 0
    %1091 = vmatprep.subr.bf16.mxu0 0
    %1092 = vmatpush1.bf16.msra.mxu0 0
    %1093 = vmatprep.mubr.bf16.mxu0 0
    %1094 = vmatmul.mubr.bf16.gmra.mrb[0].mxu0 %v1060
    %v1095 = vpop.f32.mrb[0].mxu0
    %v1096 = vadd.f32 0.0, %v1095
    %v1097 = vpop.f32.mrb[0].mxu0
    %v1098 = vadd.f32 0.0, %v1097
    %v1099 = vpop.f32.mrb[0].mxu0
    %v1100 = vpop.f32.mrb[0].mxu0
    %1101 = vdwg.mxu0
    %1102 = vmatprep.subr.bf16.mxu0 %v455
    %1103 = vmatpush1.bf16.msra.mxu0 %v454
    %1104 = vmatprep.subr.bf16.mxu0 %v459
    %1105 = vmatpush1.bf16.msra.mxu0 %v458
    %1106 = vmatprep.subr.bf16.mxu0 %v463
    %1107 = vmatpush1.bf16.msra.mxu0 %v462
    %1108 = vmatprep.subr.bf16.mxu0 %v467
    %1109 = vmatpush1.bf16.msra.mxu0 %v466
    %1110 = vmatprep.subr.bf16.mxu0 %v471
    %1111 = vmatpush1.bf16.msra.mxu0 %v470
    %1112 = vmatprep.subr.bf16.mxu0 %v475
    %1113 = vmatpush1.bf16.msra.mxu0 %v474
    %1114 = vmatprep.subr.bf16.mxu0 %v479
    %1115 = vmatpush1.bf16.msra.mxu0 %v478
    %1116 = vmatprep.subr.bf16.mxu0 %v483
    %1117 = vmatpush1.bf16.msra.mxu0 %v482
    %1118 = vmatprep.subr.bf16.mxu0 0
    %1119 = vmatpush1.bf16.msra.mxu0 0
    %1120 = vmatprep.subr.bf16.mxu0 0
    %1121 = vmatpush1.bf16.msra.mxu0 0
    %1122 = vmatprep.subr.bf16.mxu0 0
    %1123 = vmatpush1.bf16.msra.mxu0 0
    %1124 = vmatprep.subr.bf16.mxu0 0
    %1125 = vmatpush1.bf16.msra.mxu0 0
    %1126 = vmatprep.subr.bf16.mxu0 0
    %1127 = vmatpush1.bf16.msra.mxu0 0
    %1128 = vmatprep.subr.bf16.mxu0 0
    %1129 = vmatpush1.bf16.msra.mxu0 0
    %1130 = vmatprep.subr.bf16.mxu0 0
    %1131 = vmatpush1.bf16.msra.mxu0 0
    %1132 = vmatprep.subr.bf16.mxu0 0
    %1133 = vmatpush1.bf16.msra.mxu0 0
    %1134 = vmatprep.mubr.bf16.mxu0 0
    %1135 = vmatmul.mubr.bf16.gmra.mrb[0].mxu0 %v1060
    %v1136 = vpop.f32.mrb[0].mxu0
    %v1137 = vadd.f32 0.0, %v1136
    %v1138 = vpop.f32.mrb[0].mxu0
    %v1139 = vadd.f32 0.0, %v1138
    %v1140 = vpop.f32.mrb[0].mxu0
    %v1141 = vpop.f32.mrb[0].mxu0
    %1142 = vdwg.mxu0
    %v1143 = vadd.f32 %v1056, %v1096
    %v1144 = vadd.f32 %v1057, %v1098
    %v1145 = vadd.f32 %v1058, %v1137
    %v1146 = vadd.f32 %v1059, %v1139
    %v1147 = vtanh.pop %v1143
    %v1148 = vtanh.pop %v1144
    %v1149 = vtanh.pop %v1145
    %v1150 = vtanh.pop %v1146
    %v1151 = vmul.f32 %v1147, 0.5
    %v1152 = vmul.f32 %v1148, 0.5
    %v1153 = vmul.f32 %v1149, 0.5
    %v1154 = vadd.f32 %v1151, 0.5
    %v1155 = vadd.f32 %v1152, 0.5
    %v1156 = vadd.f32 %v1153, 0.5
    %v1157 = vmul.f32 %v1155, %v1050
    %v1158 = vmul.f32 %v1154, %v1150
    %v1159 = vadd.f32 %v1157, %v1158
    %v1160 = vtanh.pop %v1159
    %v1161 = vmul.f32 %v1156, %v1160
    %s1162 = smul.u32 6, 4
    %s1163 = smul.addr %s1162, 8
    %s1164 = scalar_lea.vmem [#allocation2], %s1163
    %v1165 = vld [vmem:[%s1164] sm:$0xff]
    %v1166 = vld [vmem:[%s1164 + $0x8] sm:$0xff]
    %v1167 = vld [vmem:[%s1164 + $0x10] sm:$0xff]
    %v1168 = vld [vmem:[%s1164 + $0x18] sm:$0xff]
    %v1169 = vpack.c.bf16 %v1161, %v1161
    %1170 = vmatprep.subr.bf16.mxu0 %v453
    %1171 = vmatpush1.bf16.msra.mxu0 %v452
    %1172 = vmatprep.subr.bf16.mxu0 %v457
    %1173 = vmatpush1.bf16.msra.mxu0 %v456
    %1174 = vmatprep.subr.bf16.mxu0 %v461
    %1175 = vmatpush1.bf16.msra.mxu0 %v460
    %1176 = vmatprep.subr.bf16.mxu0 %v465
    %1177 = vmatpush1.bf16.msra.mxu0 %v464
    %1178 = vmatprep.subr.bf16.mxu0 %v469
    %1179 = vmatpush1.bf16.msra.mxu0 %v468
    %1180 = vmatprep.subr.bf16.mxu0 %v473
    %1181 = vmatpush1.bf16.msra.mxu0 %v472
    %1182 = vmatprep.subr.bf16.mxu0 %v477
    %1183 = vmatpush1.bf16.msra.mxu0 %v476
    %1184 = vmatprep.subr.bf16.mxu0 %v481
    %1185 = vmatpush1.bf16.msra.mxu0 %v480
    %1186 = vmatprep.subr.bf16.mxu0 0
    %1187 = vmatpush1.bf16.msra.mxu0 0
    %1188 = vmatprep.subr.bf16.mxu0 0
    %1189 = vmatpush1.bf16.msra.mxu0 0
    %1190 = vmatprep.subr.bf16.mxu0 0
    %1191 = vmatpush1.bf16.msra.mxu0 0
    %1192 = vmatprep.subr.bf16.mxu0 0
    %1193 = vmatpush1.bf16.msra.mxu0 0
    %1194 = vmatprep.subr.bf16.mxu0 0
    %1195 = vmatpush1.bf16.msra.mxu0 0
    %1196 = vmatprep.subr.bf16.mxu0 0
    %1197 = vmatpush1.bf16.msra.mxu0 0
    %1198 = vmatprep.subr.bf16.mxu0 0
    %1199 = vmatpush1.bf16.msra.mxu0 0
    %1200 = vmatprep.subr.bf16.mxu0 0
    %1201 = vmatpush1.bf16.msra.mxu0 0
    %1202 = vmatprep.mubr.bf16.mxu0 0
    %1203 = vmatmul.mubr.bf16.gmra.mrb[0].mxu0 %v1169
    %v1204 = vpop.f32.mrb[0].mxu0
    %v1205 = vadd.f32 0.0, %v1204
    %v1206 = vpop.f32.mrb[0].mxu0
    %v1207 = vadd.f32 0.0, %v1206
    %v1208 = vpop.f32.mrb[0].mxu0
    %v1209 = vpop.f32.mrb[0].mxu0
    %1210 = vdwg.mxu0
    %1211 = vmatprep.subr.bf16.mxu0 %v455
    %1212 = vmatpush1.bf16.msra.mxu0 %v454
    %1213 = vmatprep.subr.bf16.mxu0 %v459
    %1214 = vmatpush1.bf16.msra.mxu0 %v458
    %1215 = vmatprep.subr.bf16.mxu0 %v463
    %1216 = vmatpush1.bf16.msra.mxu0 %v462
    %1217 = vmatprep.subr.bf16.mxu0 %v467
    %1218 = vmatpush1.bf16.msra.mxu0 %v466
    %1219 = vmatprep.subr.bf16.mxu0 %v471
    %1220 = vmatpush1.bf16.msra.mxu0 %v470
    %1221 = vmatprep.subr.bf16.mxu0 %v475
    %1222 = vmatpush1.bf16.msra.mxu0 %v474
    %1223 = vmatprep.subr.bf16.mxu0 %v479
    %1224 = vmatpush1.bf16.msra.mxu0 %v478
    %1225 = vmatprep.subr.bf16.mxu0 %v483
    %1226 = vmatpush1.bf16.msra.mxu0 %v482
    %1227 = vmatprep.subr.bf16.mxu0 0
    %1228 = vmatpush1.bf16.msra.mxu0 0
    %1229 = vmatprep.subr.bf16.mxu0 0
    %1230 = vmatpush1.bf16.msra.mxu0 0
    %1231 = vmatprep.subr.bf16.mxu0 0
    %1232 = vmatpush1.bf16.msra.mxu0 0
    %1233 = vmatprep.subr.bf16.mxu0 0
    %1234 = vmatpush1.bf16.msra.mxu0 0
    %1235 = vmatprep.subr.bf16.mxu0 0
    %1236 = vmatpush1.bf16.msra.mxu0 0
    %1237 = vmatprep.subr.bf16.mxu0 0
    %1238 = vmatpush1.bf16.msra.mxu0 0
    %1239 = vmatprep.subr.bf16.mxu0 0
    %1240 = vmatpush1.bf16.msra.mxu0 0
    %1241 = vmatprep.subr.bf16.mxu0 0
    %1242 = vmatpush1.bf16.msra.mxu0 0
    %1243 = vmatprep.mubr.bf16.mxu0 0
    %1244 = vmatmul.mubr.bf16.gmra.mrb[0].mxu0 %v1169
    %v1245 = vpop.f32.mrb[0].mxu0
    %v1246 = vadd.f32 0.0, %v1245
    %v1247 = vpop.f32.mrb[0].mxu0
    %v1248 = vadd.f32 0.0, %v1247
    %v1249 = vpop.f32.mrb[0].mxu0
    %v1250 = vpop.f32.mrb[0].mxu0
    %1251 = vdwg.mxu0
    %v1252 = vadd.f32 %v1165, %v1205
    %v1253 = vadd.f32 %v1166, %v1207
    %v1254 = vadd.f32 %v1167, %v1246
    %v1255 = vadd.f32 %v1168, %v1248
    %v1256 = vtanh.pop %v1252
    %v1257 = vtanh.pop %v1253
    %v1258 = vtanh.pop %v1254
    %v1259 = vtanh.pop %v1255
    %v1260 = vmul.f32 %v1256, 0.5
    %v1261 = vmul.f32 %v1257, 0.5
    %v1262 = vmul.f32 %v1258, 0.5
    %v1263 = vadd.f32 %v1260, 0.5
    %v1264 = vadd.f32 %v1261, 0.5
    %v1265 = vadd.f32 %v1262, 0.5
    %v1266 = vmul.f32 %v1264, %v1159
    %v1267 = vmul.f32 %v1263, %v1259
    %v1268 = vadd.f32 %v1266, %v1267
    %v1269 = vtanh.pop %v1268
    %v1270 = vmul.f32 %v1265, %v1269
    %s1271 = smul.u32 7, 4
    %s1272 = smul.addr %s1271, 8
    %s1273 = scalar_lea.vmem [#allocation2], %s1272
    %v1274 = vld [vmem:[%s1273] sm:$0xff]
    %v1275 = vld [vmem:[%s1273 + $0x8] sm:$0xff]
    %v1276 = vld [vmem:[%s1273 + $0x10] sm:$0xff]
    %v1277 = vld [vmem:[%s1273 + $0x18] sm:$0xff]
    %v1278 = vpack.c.bf16 %v1270, %v1270
    %1279 = vmatprep.subr.bf16.mxu0 %v453
    %1280 = vmatpush1.bf16.msra.mxu0 %v452
    %1281 = vmatprep.subr.bf16.mxu0 %v457
    %1282 = vmatpush1.bf16.msra.mxu0 %v456
    %1283 = vmatprep.subr.bf16.mxu0 %v461
    %1284 = vmatpush1.bf16.msra.mxu0 %v460
    %1285 = vmatprep.subr.bf16.mxu0 %v465
    %1286 = vmatpush1.bf16.msra.mxu0 %v464
    %1287 = vmatprep.subr.bf16.mxu0 %v469
    %1288 = vmatpush1.bf16.msra.mxu0 %v468
    %1289 = vmatprep.subr.bf16.mxu0 %v473
    %1290 = vmatpush1.bf16.msra.mxu0 %v472
    %1291 = vmatprep.subr.bf16.mxu0 %v477
    %1292 = vmatpush1.bf16.msra.mxu0 %v476
    %1293 = vmatprep.subr.bf16.mxu0 %v481
    %1294 = vmatpush1.bf16.msra.mxu0 %v480
    %1295 = vmatprep.subr.bf16.mxu0 0
    %1296 = vmatpush1.bf16.msra.mxu0 0
    %1297 = vmatprep.subr.bf16.mxu0 0
    %1298 = vmatpush1.bf16.msra.mxu0 0
    %1299 = vmatprep.subr.bf16.mxu0 0
    %1300 = vmatpush1.bf16.msra.mxu0 0
    %1301 = vmatprep.subr.bf16.mxu0 0
    %1302 = vmatpush1.bf16.msra.mxu0 0
    %1303 = vmatprep.subr.bf16.mxu0 0
    %1304 = vmatpush1.bf16.msra.mxu0 0
    %1305 = vmatprep.subr.bf16.mxu0 0
    %1306 = vmatpush1.bf16.msra.mxu0 0
    %1307 = vmatprep.subr.bf16.mxu0 0
    %1308 = vmatpush1.bf16.msra.mxu0 0
    %1309 = vmatprep.subr.bf16.mxu0 0
    %1310 = vmatpush1.bf16.msra.mxu0 0
    %1311 = vmatprep.mubr.bf16.mxu0 0
    %1312 = vmatmul.mubr.bf16.gmra.mrb[0].mxu0 %v1278
    %v1313 = vpop.f32.mrb[0].mxu0
    %v1314 = vadd.f32 0.0, %v1313
    %v1315 = vpop.f32.mrb[0].mxu0
    %v1316 = vadd.f32 0.0, %v1315
    %v1317 = vpop.f32.mrb[0].mxu0
    %v1318 = vpop.f32.mrb[0].mxu0
    %1319 = vdwg.mxu0
    %1320 = vmatprep.subr.bf16.mxu0 %v455
    %1321 = vmatpush1.bf16.msra.mxu0 %v454
    %1322 = vmatprep.subr.bf16.mxu0 %v459
    %1323 = vmatpush1.bf16.msra.mxu0 %v458
    %1324 = vmatprep.subr.bf16.mxu0 %v463
    %1325 = vmatpush1.bf16.msra.mxu0 %v462
    %1326 = vmatprep.subr.bf16.mxu0 %v467
    %1327 = vmatpush1.bf16.msra.mxu0 %v466
    %1328 = vmatprep.subr.bf16.mxu0 %v471
    %1329 = vmatpush1.bf16.msra.mxu0 %v470
    %1330 = vmatprep.subr.bf16.mxu0 %v475
    %1331 = vmatpush1.bf16.msra.mxu0 %v474
    %1332 = vmatprep.subr.bf16.mxu0 %v479
    %1333 = vmatpush1.bf16.msra.mxu0 %v478
    %1334 = vmatprep.subr.bf16.mxu0 %v483
    %1335 = vmatpush1.bf16.msra.mxu0 %v482
    %1336 = vmatprep.subr.bf16.mxu0 0
    %1337 = vmatpush1.bf16.msra.mxu0 0
    %1338 = vmatprep.subr.bf16.mxu0 0
    %1339 = vmatpush1.bf16.msra.mxu0 0
    %1340 = vmatprep.subr.bf16.mxu0 0
    %1341 = vmatpush1.bf16.msra.mxu0 0
    %1342 = vmatprep.subr.bf16.mxu0 0
    %1343 = vmatpush1.bf16.msra.mxu0 0
    %1344 = vmatprep.subr.bf16.mxu0 0
    %1345 = vmatpush1.bf16.msra.mxu0 0
    %1346 = vmatprep.subr.bf16.mxu0 0
    %1347 = vmatpush1.bf16.msra.mxu0 0
    %1348 = vmatprep.subr.bf16.mxu0 0
    %1349 = vmatpush1.bf16.msra.mxu0 0
    %1350 = vmatprep.subr.bf16.mxu0 0
    %1351 = vmatpush1.bf16.msra.mxu0 0
    %1352 = vmatprep.mubr.bf16.mxu0 0
    %1353 = vmatmul.mubr.bf16.gmra.mrb[0].mxu0 %v1278
    %v1354 = vpop.f32.mrb[0].mxu0
    %v1355 = vadd.f32 0.0, %v1354
    %v1356 = vpop.f32.mrb[0].mxu0
    %v1357 = vadd.f32 0.0, %v1356
    %v1358 = vpop.f32.mrb[0].mxu0
    %v1359 = vpop.f32.mrb[0].mxu0
    %1360 = vdwg.mxu0
    %v1361 = vadd.f32 %v1274, %v1314
    %v1362 = vadd.f32 %v1275, %v1316
    %v1363 = vadd.f32 %v1276, %v1355
    %v1364 = vadd.f32 %v1277, %v1357
    %v1365 = vtanh.pop %v1361
    %v1366 = vtanh.pop %v1362
    %v1367 = vtanh.pop %v1363
    %v1368 = vtanh.pop %v1364
    %v1369 = vmul.f32 %v1365, 0.5
    %v1370 = vmul.f32 %v1366, 0.5
    %v1371 = vmul.f32 %v1367, 0.5
    %v1372 = vadd.f32 %v1369, 0.5
    %v1373 = vadd.f32 %v1370, 0.5
    %v1374 = vadd.f32 %v1371, 0.5
    %v1375 = vmul.f32 %v1373, %v1268
    %v1376 = vmul.f32 %v1372, %v1368
    %v1377 = vadd.f32 %v1375, %v1376
    %v1378 = vtanh.pop %v1377
    %v1379 = vmul.f32 %v1374, %v1378
    %v1380 = vpack.c.bf16 %v1379, %v1379
    %v1381 = vld [vmem:[%s4] sm:$0xf]
    %v1382 = vld [vmem:[%s4 + $0x4] sm:$0xf]
    %v1383 = vld [vmem:[%s4 + $0x8] sm:$0xf]
    %v1384 = vld [vmem:[%s4 + $0xc] sm:$0xf]
    %v1385 = vld [vmem:[%s4 + $0x10] sm:$0xf]
    %v1386 = vld [vmem:[%s4 + $0x14] sm:$0xf]
    %v1387 = vld [vmem:[%s4 + $0x18] sm:$0xf]
    %v1388 = vld [vmem:[%s4 + $0x1c] sm:$0xf]
    %v1389 = vld [vmem:[%s4 + $0x20] sm:$0xf]
    %v1390 = vld [vmem:[%s4 + $0x24] sm:$0xf]
    %v1391 = vld [vmem:[%s4 + $0x28] sm:$0xf]
    %v1392 = vld [vmem:[%s4 + $0x2c] sm:$0xf]
    %v1393 = vld [vmem:[%s4 + $0x30] sm:$0xf]
    %v1394 = vld [vmem:[%s4 + $0x34] sm:$0xf]
    %v1395 = vld [vmem:[%s4 + $0x38] sm:$0xf]
    %v1396 = vld [vmem:[%s4 + $0x3c] sm:$0xf]
    %v1397 = vld [vmem:[%s5] sm:$0x1]
    %v1399 = vlaneseq
    %v1400 = vshrl.u32 %v1399, 7
    %v1401 = vsub.s32 0, %v1400
    %v1402 = vrot.slane %v1397, %v1401
    %v1420 = vunpack.c.l.b16 %v1381
    %v1421 = vunpack.c.l.b16 %v1382
    %v1422 = vunpack.c.l.b16 %v1383
    %v1423 = vunpack.c.l.b16 %v1384
    %v1424 = vunpack.c.l.b16 %v1385
    %v1425 = vunpack.c.l.b16 %v1386
    %v1426 = vunpack.c.l.b16 %v1387
    %v1427 = vunpack.c.l.b16 %v1388
    %v1428 = vunpack.c.l.b16 %v1389
    %v1429 = vunpack.c.l.b16 %v1390
    %v1430 = vunpack.c.l.b16 %v1391
    %v1431 = vunpack.c.l.b16 %v1392
    %v1432 = vunpack.c.l.b16 %v1393
    %v1433 = vunpack.c.l.b16 %v1394
    %v1434 = vunpack.c.l.b16 %v1395
    %v1435 = vunpack.c.l.b16 %v1396
    %v1436 = vpack.c.b16 %v1421, %v1420
    %v1437 = vpack.c.b16 %v1423, %v1422
    %v1438 = vpack.c.b16 %v1425, %v1424
    %v1439 = vpack.c.b16 %v1427, %v1426
    %v1440 = vpack.c.b16 %v1429, %v1428
    %v1441 = vpack.c.b16 %v1431, %v1430
    %v1442 = vpack.c.b16 %v1433, %v1432
    %v1443 = vpack.c.b16 %v1435, %v1434
    %1452 = vmatprep.subr.bf16.mxu0 0
    %1453 = vmatpush1.bf16.msra.mxu0 %v1436
    %1454 = vmatprep.subr.bf16.mxu0 0
    %1455 = vmatpush1.bf16.msra.mxu0 %v1437
    %1456 = vmatprep.subr.bf16.mxu0 0
    %1457 = vmatpush1.bf16.msra.mxu0 %v1438
    %1458 = vmatprep.subr.bf16.mxu0 0
    %1459 = vmatpush1.bf16.msra.mxu0 %v1439
    %1460 = vmatprep.subr.bf16.mxu0 0
    %1461 = vmatpush1.bf16.msra.mxu0 %v1440
    %1462 = vmatprep.subr.bf16.mxu0 0
    %1463 = vmatpush1.bf16.msra.mxu0 %v1441
    %1464 = vmatprep.subr.bf16.mxu0 0
    %1465 = vmatpush1.bf16.msra.mxu0 %v1442
    %1466 = vmatprep.subr.bf16.mxu0 0
    %1467 = vmatpush1.bf16.msra.mxu0 %v1443
    %1468 = vmatprep.subr.bf16.mxu0 0
    %1469 = vmatpush1.bf16.msra.mxu0 0
    %1470 = vmatprep.subr.bf16.mxu0 0
    %1471 = vmatpush1.bf16.msra.mxu0 0
    %1472 = vmatprep.subr.bf16.mxu0 0
    %1473 = vmatpush1.bf16.msra.mxu0 0
    %1474 = vmatprep.subr.bf16.mxu0 0
    %1475 = vmatpush1.bf16.msra.mxu0 0
    %1476 = vmatprep.subr.bf16.mxu0 0
    %1477 = vmatpush1.bf16.msra.mxu0 0
    %1478 = vmatprep.subr.bf16.mxu0 0
    %1479 = vmatpush1.bf16.msra.mxu0 0
    %1480 = vmatprep.subr.bf16.mxu0 0
    %1481 = vmatpush1.bf16.msra.mxu0 0
    %1482 = vmatprep.subr.bf16.mxu0 0
    %1483 = vmatpush1.bf16.msra.mxu0 0
    %1484 = vmatprep.mubr.bf16.mxu0 0
    %1485 = vmatmul.mubr.bf16.gmra.mrb[0].mxu0 %v1380
    %v1486 = vpop.f32.mrb[0].mxu0
    %v1487 = vadd.f32 %v1402, %v1486
    %v1488 = vpop.f32.mrb[0].mxu0
    %v1489 = vpop.f32.mrb[0].mxu0
    %v1490 = vpop.f32.mrb[0].mxu0
    %1491 = vdwg.mxu0
    %1492 = vst [vmem:[%s6] sm:$0xff] %v1487
    // Predicated region
    $region34: #{lstm_model_forward.1} parent=1 // pred_check
      _
    $region35: #{lstm_model_forward.1} parent=1 // pred_check_branch
      %1494 = sbr.rel (0) target = $region37
    $region36: #{lstm_model_forward.1} parent=1 // pred_region
      _
    $region37: #{lstm_model_forward.1} parent=1 // pred_fallthru
      _
    // Predicated region
    $region38: #{lstm_model_forward.1} parent=1 // pred_check
      _
    $region39: #{lstm_model_forward.1} parent=1 // pred_check_branch
      %1496 = sbr.rel (0) target = $region41
    $region40: #{lstm_model_forward.1} parent=1 // pred_region
      _
    $region41: #{lstm_model_forward.1} parent=1 // pred_fallthru
      _
    %1497 = vsyncpa [#allocation4], 1
    %1498 = vsyncpa [#allocation6], 1

</llo_original>
